<compile_context>
chip_gen: v6e
topology: v6e:2x2x1
jax: 0.10.0
libtpu: 0.0.40
codegen_flags: <defaults>
</compile_context>

<pallas_src>
import functools

import numpy as np
import jax
import jax.numpy as jnp
from jax.experimental import pallas as pl
from jax.experimental.pallas import tpu as pltpu

NQ_F, NQ_G, NQ_O = 5, 4, 3           # n_qubits of coupled_IF / candidate / output circuits
NQ_ALL = NQ_F + NQ_G + NQ_O          # 12


# ----------------------------------------------------------------------------- kernel
def _cifg_qlstm_kernel(
    xproj_ref,                 # (T, B, 12)  precomputed x_t @ W_x_all + b_in_all
    h0_ref, c0_ref,            # (B, H)
    w_h_ref,                   # (H, 12)     fused qin weights (recurrent h-part)
    w_out_ref,                 # (12, 3H)    block-diagonal fused qout weights
    b_out_ref,                 # (1, 3H)
    hseq_ref, hT_ref, cT_ref,  # outputs: (T, B, H), (B, H), (B, H)
):
    T, B, _ = xproj_ref.shape
    H = h0_ref.shape[-1]

    # Weights resident for the whole loop; bias broadcast hoisted out of the time loop
    # (JAX does not CSE broadcast_in_dim inside loops).
    w_h = w_h_ref[...]                                      # (H, 12)
    w_out = w_out_ref[...]                                  # (12, 3H)
    b_out = jnp.broadcast_to(b_out_ref[...], (B, 3 * H))    # (B, 3H)

    def step(t, carry):
        h, c = carry
        # fused qin: only the recurrent h-projection stays on the serial path;
        # the x-projection (+ qin bias) was hoisted into xproj.
        z = jnp.dot(h, w_h, preferred_element_type=jnp.float32) + xproj_ref[t]    # (B, 12)
        # TODO(synk): the variational quantum circuit (pyQPanda VQC: H/RY/U gates + CZ ring)
        # between qin and qout has no Pallas equivalent; only the classical path is computed,
        # so the per-gate `angles` parameters are unused.
        gates = jnp.dot(z, w_out, preferred_element_type=jnp.float32) + b_out     # (B, 3H)
        f_t = jax.nn.sigmoid(gates[:, :H])
        g_t = jnp.tanh(gates[:, H:2 * H])
        o_t = jax.nn.sigmoid(gates[:, 2 * H:])
        c_new = g_t + f_t * (c - g_t)          # == f*c + (1-f)*g  (coupled input/forget gate)
        h_new = o_t * jnp.tanh(c_new)
        hseq_ref[t] = h_new                    # stays in VMEM; single HBM writeback at the end
        return h_new, c_new

    h_fin, c_fin = jax.lax.fori_loop(
        0, T, step, (h0_ref[...], c0_ref[...]), unroll=True)
    hT_ref[...] = h_fin
    cT_ref[...] = c_fin


# ----------------------------------------------------------------------------- param fusion
def fuse_params(params, hidden_size):
    """Fuse the 3 per-gate (qin, qout) Linear layers into single matmul operands."""
    (whf, wxf, bif, wof, bof,
     whg, wxg, big, wog, bog,
     who, wxo, bio, woo, boo) = params
    H = hidden_size
    w_h_all = jnp.concatenate([whf, whg, who], axis=1)            # (H, 12)
    w_x_all = jnp.concatenate([wxf, wxg, wxo], axis=1)            # (I, 12)
    b_in_all = jnp.concatenate([bif, big, bio], axis=1)           # (1, 12)
    # block-diagonal fused qout: gates[:, :H] == z[:, :5] @ wof + bof, etc.
    w_out_all = jnp.zeros((NQ_ALL, 3 * H), jnp.float32)
    w_out_all = w_out_all.at[:NQ_F, :H].set(wof)
    w_out_all = w_out_all.at[NQ_F:NQ_F + NQ_G, H:2 * H].set(wog)
    w_out_all = w_out_all.at[NQ_F + NQ_G:, 2 * H:].set(woo)
    b_out_all = jnp.concatenate([bof, bog, boo], axis=1)          # (1, 3H)
    return w_h_all, w_x_all, b_in_all, w_out_all, b_out_all


# ----------------------------------------------------------------------------- wrapper
def cifg_qlstm(x, h0, c0, params):
    """x: (T, B, I) f32; h0, c0: (B, H) f32; params: flat list of 15 weight arrays."""
    T, B, I = x.shape
    H = h0.shape[-1]
    w_h_all, w_x_all, b_in_all, w_out_all, b_out_all = fuse_params(params, H)

    # Hoisted x-projection: one big batched matmul for all T steps (off the recurrent
    # critical path, fully pipelineable by XLA).  x_proj[t] = x_t @ W_x_all + b_in_all.
    x_proj = (jnp.dot(x.reshape(T * B, I), w_x_all,
                      preferred_element_type=jnp.float32) + b_in_all
              ).reshape(T, B, NQ_ALL)

    vmem = lambda: pl.BlockSpec(memory_space=pltpu.MemorySpace.VMEM)

    hseq, h_t, c_t = pl.pallas_call(
        _cifg_qlstm_kernel,
        out_shape=[
            jax.ShapeDtypeStruct((T, B, H), jnp.float32),
            jax.ShapeDtypeStruct((B, H), jnp.float32),
            jax.ShapeDtypeStruct((B, H), jnp.float32),
        ],
        in_specs=[vmem() for _ in range(6)],
        out_specs=[vmem() for _ in range(3)],
    )(x_proj, h0, c0, w_h_all, w_out_all, b_out_all)

    # PyTorch: hidden_sequence = torch.cat([h_1, ..., h_T], dim=0) with each h_t (B, H)
    return hseq.reshape(T * B, H), (h_t, c_t)


# ----------------------------------------------------------------------------- params
def init_params(key, input_size, hidden_size):
    """Deterministic init mirroring the shapes of CIFGQLSTM.__init__ (PyTorch Linear-style)."""
    def linear(k, fan_in, fan_out):
        k1, k2 = jax.random.split(k)
        bound = 1.0 / (fan_in ** 0.5)
        w = jax.random.uniform(k1, (fan_in, fan_out), jnp.float32, -bound, bound)  # W^T layout
        b = jax.random.uniform(k2, (1, fan_out), jnp.float32, -bound, bound)
        return w, b

    params = []
    gate_nq = (NQ_F, NQ_G, NQ_O)          # coupled_IF, candidate, output circuits
    keys = jax.random.split(key, len(gate_nq))
    for k, nq in zip(keys, gate_nq):
        k_in, k_out = jax.random.split(k)
        w_in, b_in = linear(k_in, hidden_size + input_size, nq)   # qin: Linear(I+H -> nq)
        w_out, b_out = linear(k_out, nq, hidden_size)             # qout: Linear(nq -> H)
        # v_t = [h_t, x_t]  ->  split qin weight into the h-rows and x-rows
        w_h = w_in[:hidden_size]       # (H, nq)
        w_x = w_in[hidden_size:]       # (I, nq)
        params += [w_h, w_x, b_in, w_out, b_out]
        # NOTE: the `angles` Parameter of each QuantumLayer is only consumed by the quantum
        # circuit (see TODO in the kernel) and is therefore unused here.
    return params


# ----------------------------------------------------------------------------- reference
def cifg_qlstm_ref(x, h0, c0, params):
    """Pure-JAX reference with UNfused per-gate projections (validates the kernel's fusion)."""
    (whf, wxf, bif, wof, bof,
     whg, wxg, big, wog, bog,
     who, wxo, bio, woo, boo) = params

    def ql(h, xt, wh, wx, bi, wo, bo):
        z = h @ wh + xt @ wx + bi
        return z @ wo + bo

    h, c = h0, c0
    hs = []
    for t in range(x.shape[0]):
        xt = x[t]
        f = jax.nn.sigmoid(ql(h, xt, whf, wxf, bif, wof, bof))
        g = jnp.tanh(ql(h, xt, whg, wxg, big, wog, bog))
        c = f * c + (1.0 - f) * g
        o = jax.nn.sigmoid(ql(h, xt, who, wxo, bio, woo, boo))
        h = o * jnp.tanh(c)
        hs.append(h)
    return jnp.concatenate(hs, axis=0), (h, c)


# ----------------------------------------------------------------------------- main
if __name__ == "__main__":
    key = jax.random.PRNGKey(0)
    T, B, input_size, hidden_size = 8, 2, 4, 32

    k_x, k_p = jax.random.split(key)
    x = jax.random.normal(k_x, (T, B, input_size), dtype=jnp.float32)
    h0 = jnp.zeros((B, hidden_size), dtype=jnp.float32)
    c0 = jnp.zeros((B, hidden_size), dtype=jnp.float32)
    params = init_params(k_p, input_size, hidden_size)

    run = jax.jit(functools.partial(cifg_qlstm))
    hidden_sequence, (h_t, c_t) = run(x, h0, c0, params)
    jax.block_until_ready((hidden_sequence, h_t, c_t))

    assert hidden_sequence.shape == (T * B, hidden_size)
    assert h_t.shape == (B, hidden_size) and c_t.shape == (B, hidden_size)

    # Correctness check against the unfused pure-JAX reference (loose tolerance to absorb
    # MXU vs XLA matmul precision differences; gate outputs are O(1)).
    ref_seq, (ref_h, ref_c) = cifg_qlstm_ref(x, h0, c0, params)
    np.testing.assert_allclose(np.asarray(hidden_sequence), np.asarray(ref_seq), atol=2e-2, rtol=0)
    np.testing.assert_allclose(np.asarray(h_t), np.asarray(ref_h), atol=2e-2, rtol=0)
    np.testing.assert_allclose(np.asarray(c_t), np.asarray(ref_c), atol=2e-2, rtol=0)

    print("KERNEL_OK")
</pallas_src>

<mosaic_0001>
module attributes {stable_mosaic.version = 11 : i64} {
  func.func @_cifg_qlstm_kernel(%arg0: memref<8x2x12xf32, #tpu.memory_space<vmem>>, %arg1: memref<2x32xf32, #tpu.memory_space<vmem>>, %arg2: memref<2x32xf32, #tpu.memory_space<vmem>>, %arg3: memref<32x12xf32, #tpu.memory_space<vmem>>, %arg4: memref<12x96xf32, #tpu.memory_space<vmem>>, %arg5: memref<1x96xf32, #tpu.memory_space<vmem>>, %arg6: memref<8x2x32xf32, #tpu.memory_space<vmem>>, %arg7: memref<2x32xf32, #tpu.memory_space<vmem>>, %arg8: memref<2x32xf32, #tpu.memory_space<vmem>>) attributes {dimension_semantics = [], scalar_prefetch = 0 : i64, scratch_operands = 0 : i64, tpu.core_type = #tpu.core_type<tc>} {
    %c0 = arith.constant 0 : index
    %c0_0 = arith.constant 0 : index
    %0 = vector.load %arg3[%c0, %c0_0] : memref<32x12xf32, #tpu.memory_space<vmem>>, vector<32x12xf32>
    %c0_1 = arith.constant 0 : index
    %c0_2 = arith.constant 0 : index
    %1 = vector.load %arg4[%c0_1, %c0_2] : memref<12x96xf32, #tpu.memory_space<vmem>>, vector<12x96xf32>
    %c0_3 = arith.constant 0 : index
    %c0_4 = arith.constant 0 : index
    %2 = vector.load %arg5[%c0_3, %c0_4] : memref<1x96xf32, #tpu.memory_space<vmem>>, vector<1x96xf32>
    %3 = vector.shape_cast %2 : vector<1x96xf32> to vector<1x96xf32>
    %4 = vector.broadcast %3 : vector<1x96xf32> to vector<2x96xf32>
    %c0_5 = arith.constant 0 : index
    %c0_6 = arith.constant 0 : index
    %5 = vector.load %arg1[%c0_5, %c0_6] : memref<2x32xf32, #tpu.memory_space<vmem>>, vector<2x32xf32>
    %c0_7 = arith.constant 0 : index
    %c0_8 = arith.constant 0 : index
    %6 = vector.load %arg2[%c0_7, %c0_8] : memref<2x32xf32, #tpu.memory_space<vmem>>, vector<2x32xf32>
    %c0_i32 = arith.constant 0 : i32
    %cst = arith.constant dense<0.000000e+00> : vector<2x12xf32>
    %7 = tpu.matmul %5, %0, %cst {dimension_numbers = #tpu.dot_dimension_numbers<[1], [0], [0], [1], [0, 0, 1, 1], [], []>} : vector<2x32xf32>, vector<32x12xf32>, vector<2x12xf32> -> vector<2x12xf32>
    %8 = arith.index_cast %c0_i32 : i32 to index
    %c0_9 = arith.constant 0 : index
    %c0_10 = arith.constant 0 : index
    %9 = vector.load %arg0[%8, %c0_9, %c0_10] : memref<8x2x12xf32, #tpu.memory_space<vmem>>, vector<1x2x12xf32>
    %10 = vector.shape_cast %9 : vector<1x2x12xf32> to vector<2x12xf32>
    %11 = arith.addf %7, %10 : vector<2x12xf32>
    %cst_11 = arith.constant dense<0.000000e+00> : vector<2x96xf32>
    %12 = tpu.matmul %11, %1, %cst_11 {dimension_numbers = #tpu.dot_dimension_numbers<[1], [0], [0], [1], [0, 0, 1, 1], [], []>} : vector<2x12xf32>, vector<12x96xf32>, vector<2x96xf32> -> vector<2x96xf32>
    %13 = arith.addf %12, %4 : vector<2x96xf32>
    %14 = vector.extract_strided_slice %13 {offsets = [0, 0], sizes = [2, 32], strides = [1, 1]} : vector<2x96xf32> to vector<2x32xf32>
    %15 = arith.negf %14 : vector<2x32xf32>
    %16 = math.exp %15 : vector<2x32xf32>
    %cst_12 = arith.constant 1.000000e+00 : f32
    %17 = vector.broadcast %cst_12 : f32 to vector<2x32xf32>
    %18 = arith.addf %17, %16 : vector<2x32xf32>
    %19 = arith.divf %17, %18 : vector<2x32xf32>
    %20 = vector.extract_strided_slice %13 {offsets = [0, 32], sizes = [2, 32], strides = [1, 1]} : vector<2x96xf32> to vector<2x32xf32>
    %21 = math.tanh %20 : vector<2x32xf32>
    %22 = vector.extract_strided_slice %13 {offsets = [0, 64], sizes = [2, 32], strides = [1, 1]} : vector<2x96xf32> to vector<2x32xf32>
    %23 = arith.negf %22 : vector<2x32xf32>
    %24 = math.exp %23 : vector<2x32xf32>
    %cst_13 = arith.constant 1.000000e+00 : f32
    %25 = vector.broadcast %cst_13 : f32 to vector<2x32xf32>
    %26 = arith.addf %25, %24 : vector<2x32xf32>
    %27 = arith.divf %25, %26 : vector<2x32xf32>
    %28 = arith.subf %6, %21 : vector<2x32xf32>
    %29 = arith.mulf %19, %28 : vector<2x32xf32>
    %30 = arith.addf %21, %29 : vector<2x32xf32>
    %31 = math.tanh %30 : vector<2x32xf32>
    %32 = arith.mulf %27, %31 : vector<2x32xf32>
    %33 = arith.index_cast %c0_i32 : i32 to index
    %c0_14 = arith.constant 0 : index
    %c0_15 = arith.constant 0 : index
    %34 = vector.load %arg6[%33, %c0_14, %c0_15] : memref<8x2x32xf32, #tpu.memory_space<vmem>>, vector<1x2x32xf32>
    %35 = vector.shape_cast %34 : vector<1x2x32xf32> to vector<2x32xf32>
    %36 = vector.shape_cast %32 : vector<2x32xf32> to vector<1x2x32xf32>
    tpu.vector_store %arg6[%33, %c0_14, %c0_15], %36 {strides = array<i32>} : memref<8x2x32xf32, #tpu.memory_space<vmem>>, vector<1x2x32xf32>,
    %c1_i32 = arith.constant 1 : i32
    %cst_16 = arith.constant dense<0.000000e+00> : vector<2x12xf32>
    %37 = tpu.matmul %32, %0, %cst_16 {dimension_numbers = #tpu.dot_dimension_numbers<[1], [0], [0], [1], [0, 0, 1, 1], [], []>} : vector<2x32xf32>, vector<32x12xf32>, vector<2x12xf32> -> vector<2x12xf32>
    %38 = arith.index_cast %c1_i32 : i32 to index
    %c0_17 = arith.constant 0 : index
    %c0_18 = arith.constant 0 : index
    %39 = vector.load %arg0[%38, %c0_17, %c0_18] : memref<8x2x12xf32, #tpu.memory_space<vmem>>, vector<1x2x12xf32>
    %40 = vector.shape_cast %39 : vector<1x2x12xf32> to vector<2x12xf32>
    %41 = arith.addf %37, %40 : vector<2x12xf32>
    %cst_19 = arith.constant dense<0.000000e+00> : vector<2x96xf32>
    %42 = tpu.matmul %41, %1, %cst_19 {dimension_numbers = #tpu.dot_dimension_numbers<[1], [0], [0], [1], [0, 0, 1, 1], [], []>} : vector<2x12xf32>, vector<12x96xf32>, vector<2x96xf32> -> vector<2x96xf32>
    %43 = arith.addf %42, %4 : vector<2x96xf32>
    %44 = vector.extract_strided_slice %43 {offsets = [0, 0], sizes = [2, 32], strides = [1, 1]} : vector<2x96xf32> to vector<2x32xf32>
    %45 = arith.negf %44 : vector<2x32xf32>
    %46 = math.exp %45 : vector<2x32xf32>
    %cst_20 = arith.constant 1.000000e+00 : f32
    %47 = vector.broadcast %cst_20 : f32 to vector<2x32xf32>
    %48 = arith.addf %47, %46 : vector<2x32xf32>
    %49 = arith.divf %47, %48 : vector<2x32xf32>
    %50 = vector.extract_strided_slice %43 {offsets = [0, 32], sizes = [2, 32], strides = [1, 1]} : vector<2x96xf32> to vector<2x32xf32>
    %51 = math.tanh %50 : vector<2x32xf32>
    %52 = vector.extract_strided_slice %43 {offsets = [0, 64], sizes = [2, 32], strides = [1, 1]} : vector<2x96xf32> to vector<2x32xf32>
    %53 = arith.negf %52 : vector<2x32xf32>
    %54 = math.exp %53 : vector<2x32xf32>
    %cst_21 = arith.constant 1.000000e+00 : f32
    %55 = vector.broadcast %cst_21 : f32 to vector<2x32xf32>
    %56 = arith.addf %55, %54 : vector<2x32xf32>
    %57 = arith.divf %55, %56 : vector<2x32xf32>
    %58 = arith.subf %30, %51 : vector<2x32xf32>
    %59 = arith.mulf %49, %58 : vector<2x32xf32>
    %60 = arith.addf %51, %59 : vector<2x32xf32>
    %61 = math.tanh %60 : vector<2x32xf32>
    %62 = arith.mulf %57, %61 : vector<2x32xf32>
    %63 = arith.index_cast %c1_i32 : i32 to index
    %c0_22 = arith.constant 0 : index
    %c0_23 = arith.constant 0 : index
    %64 = vector.load %arg6[%63, %c0_22, %c0_23] : memref<8x2x32xf32, #tpu.memory_space<vmem>>, vector<1x2x32xf32>
    %65 = vector.shape_cast %64 : vector<1x2x32xf32> to vector<2x32xf32>
    %66 = vector.shape_cast %62 : vector<2x32xf32> to vector<1x2x32xf32>
    tpu.vector_store %arg6[%63, %c0_22, %c0_23], %66 {strides = array<i32>} : memref<8x2x32xf32, #tpu.memory_space<vmem>>, vector<1x2x32xf32>,
    %c2_i32 = arith.constant 2 : i32
    %cst_24 = arith.constant dense<0.000000e+00> : vector<2x12xf32>
    %67 = tpu.matmul %62, %0, %cst_24 {dimension_numbers = #tpu.dot_dimension_numbers<[1], [0], [0], [1], [0, 0, 1, 1], [], []>} : vector<2x32xf32>, vector<32x12xf32>, vector<2x12xf32> -> vector<2x12xf32>
    %68 = arith.index_cast %c2_i32 : i32 to index
    %c0_25 = arith.constant 0 : index
    %c0_26 = arith.constant 0 : index
    %69 = vector.load %arg0[%68, %c0_25, %c0_26] : memref<8x2x12xf32, #tpu.memory_space<vmem>>, vector<1x2x12xf32>
    %70 = vector.shape_cast %69 : vector<1x2x12xf32> to vector<2x12xf32>
    %71 = arith.addf %67, %70 : vector<2x12xf32>
    %cst_27 = arith.constant dense<0.000000e+00> : vector<2x96xf32>
    %72 = tpu.matmul %71, %1, %cst_27 {dimension_numbers = #tpu.dot_dimension_numbers<[1], [0], [0], [1], [0, 0, 1, 1], [], []>} : vector<2x12xf32>, vector<12x96xf32>, vector<2x96xf32> -> vector<2x96xf32>
    %73 = arith.addf %72, %4 : vector<2x96xf32>
    %74 = vector.extract_strided_slice %73 {offsets = [0, 0], sizes = [2, 32], strides = [1, 1]} : vector<2x96xf32> to vector<2x32xf32>
    %75 = arith.negf %74 : vector<2x32xf32>
    %76 = math.exp %75 : vector<2x32xf32>
    %cst_28 = arith.constant 1.000000e+00 : f32
    %77 = vector.broadcast %cst_28 : f32 to vector<2x32xf32>
    %78 = arith.addf %77, %76 : vector<2x32xf32>
    %79 = arith.divf %77, %78 : vector<2x32xf32>
    %80 = vector.extract_strided_slice %73 {offsets = [0, 32], sizes = [2, 32], strides = [1, 1]} : vector<2x96xf32> to vector<2x32xf32>
    %81 = math.tanh %80 : vector<2x32xf32>
    %82 = vector.extract_strided_slice %73 {offsets = [0, 64], sizes = [2, 32], strides = [1, 1]} : vector<2x96xf32> to vector<2x32xf32>
    %83 = arith.negf %82 : vector<2x32xf32>
    %84 = math.exp %83 : vector<2x32xf32>
    %cst_29 = arith.constant 1.000000e+00 : f32
    %85 = vector.broadcast %cst_29 : f32 to vector<2x32xf32>
    %86 = arith.addf %85, %84 : vector<2x32xf32>
    %87 = arith.divf %85, %86 : vector<2x32xf32>
    %88 = arith.subf %60, %81 : vector<2x32xf32>
    %89 = arith.mulf %79, %88 : vector<2x32xf32>
    %90 = arith.addf %81, %89 : vector<2x32xf32>
    %91 = math.tanh %90 : vector<2x32xf32>
    %92 = arith.mulf %87, %91 : vector<2x32xf32>
    %93 = arith.index_cast %c2_i32 : i32 to index
    %c0_30 = arith.constant 0 : index
    %c0_31 = arith.constant 0 : index
    %94 = vector.load %arg6[%93, %c0_30, %c0_31] : memref<8x2x32xf32, #tpu.memory_space<vmem>>, vector<1x2x32xf32>
    %95 = vector.shape_cast %94 : vector<1x2x32xf32> to vector<2x32xf32>
    %96 = vector.shape_cast %92 : vector<2x32xf32> to vector<1x2x32xf32>
    tpu.vector_store %arg6[%93, %c0_30, %c0_31], %96 {strides = array<i32>} : memref<8x2x32xf32, #tpu.memory_space<vmem>>, vector<1x2x32xf32>,
    %c3_i32 = arith.constant 3 : i32
    %cst_32 = arith.constant dense<0.000000e+00> : vector<2x12xf32>
    %97 = tpu.matmul %92, %0, %cst_32 {dimension_numbers = #tpu.dot_dimension_numbers<[1], [0], [0], [1], [0, 0, 1, 1], [], []>} : vector<2x32xf32>, vector<32x12xf32>, vector<2x12xf32> -> vector<2x12xf32>
    %98 = arith.index_cast %c3_i32 : i32 to index
    %c0_33 = arith.constant 0 : index
    %c0_34 = arith.constant 0 : index
    %99 = vector.load %arg0[%98, %c0_33, %c0_34] : memref<8x2x12xf32, #tpu.memory_space<vmem>>, vector<1x2x12xf32>
    %100 = vector.shape_cast %99 : vector<1x2x12xf32> to vector<2x12xf32>
    %101 = arith.addf %97, %100 : vector<2x12xf32>
    %cst_35 = arith.constant dense<0.000000e+00> : vector<2x96xf32>
    %102 = tpu.matmul %101, %1, %cst_35 {dimension_numbers = #tpu.dot_dimension_numbers<[1], [0], [0], [1], [0, 0, 1, 1], [], []>} : vector<2x12xf32>, vector<12x96xf32>, vector<2x96xf32> -> vector<2x96xf32>
    %103 = arith.addf %102, %4 : vector<2x96xf32>
    %104 = vector.extract_strided_slice %103 {offsets = [0, 0], sizes = [2, 32], strides = [1, 1]} : vector<2x96xf32> to vector<2x32xf32>
    %105 = arith.negf %104 : vector<2x32xf32>
    %106 = math.exp %105 : vector<2x32xf32>
    %cst_36 = arith.constant 1.000000e+00 : f32
    %107 = vector.broadcast %cst_36 : f32 to vector<2x32xf32>
    %108 = arith.addf %107, %106 : vector<2x32xf32>
    %109 = arith.divf %107, %108 : vector<2x32xf32>
    %110 = vector.extract_strided_slice %103 {offsets = [0, 32], sizes = [2, 32], strides = [1, 1]} : vector<2x96xf32> to vector<2x32xf32>
    %111 = math.tanh %110 : vector<2x32xf32>
    %112 = vector.extract_strided_slice %103 {offsets = [0, 64], sizes = [2, 32], strides = [1, 1]} : vector<2x96xf32> to vector<2x32xf32>
    %113 = arith.negf %112 : vector<2x32xf32>
    %114 = math.exp %113 : vector<2x32xf32>
    %cst_37 = arith.constant 1.000000e+00 : f32
    %115 = vector.broadcast %cst_37 : f32 to vector<2x32xf32>
    %116 = arith.addf %115, %114 : vector<2x32xf32>
    %117 = arith.divf %115, %116 : vector<2x32xf32>
    %118 = arith.subf %90, %111 : vector<2x32xf32>
    %119 = arith.mulf %109, %118 : vector<2x32xf32>
    %120 = arith.addf %111, %119 : vector<2x32xf32>
    %121 = math.tanh %120 : vector<2x32xf32>
    %122 = arith.mulf %117, %121 : vector<2x32xf32>
    %123 = arith.index_cast %c3_i32 : i32 to index
    %c0_38 = arith.constant 0 : index
    %c0_39 = arith.constant 0 : index
    %124 = vector.load %arg6[%123, %c0_38, %c0_39] : memref<8x2x32xf32, #tpu.memory_space<vmem>>, vector<1x2x32xf32>
    %125 = vector.shape_cast %124 : vector<1x2x32xf32> to vector<2x32xf32>
    %126 = vector.shape_cast %122 : vector<2x32xf32> to vector<1x2x32xf32>
    tpu.vector_store %arg6[%123, %c0_38, %c0_39], %126 {strides = array<i32>} : memref<8x2x32xf32, #tpu.memory_space<vmem>>, vector<1x2x32xf32>,
    %c4_i32 = arith.constant 4 : i32
    %cst_40 = arith.constant dense<0.000000e+00> : vector<2x12xf32>
    %127 = tpu.matmul %122, %0, %cst_40 {dimension_numbers = #tpu.dot_dimension_numbers<[1], [0], [0], [1], [0, 0, 1, 1], [], []>} : vector<2x32xf32>, vector<32x12xf32>, vector<2x12xf32> -> vector<2x12xf32>
    %128 = arith.index_cast %c4_i32 : i32 to index
    %c0_41 = arith.constant 0 : index
    %c0_42 = arith.constant 0 : index
    %129 = vector.load %arg0[%128, %c0_41, %c0_42] : memref<8x2x12xf32, #tpu.memory_space<vmem>>, vector<1x2x12xf32>
    %130 = vector.shape_cast %129 : vector<1x2x12xf32> to vector<2x12xf32>
    %131 = arith.addf %127, %130 : vector<2x12xf32>
    %cst_43 = arith.constant dense<0.000000e+00> : vector<2x96xf32>
    %132 = tpu.matmul %131, %1, %cst_43 {dimension_numbers = #tpu.dot_dimension_numbers<[1], [0], [0], [1], [0, 0, 1, 1], [], []>} : vector<2x12xf32>, vector<12x96xf32>, vector<2x96xf32> -> vector<2x96xf32>
    %133 = arith.addf %132, %4 : vector<2x96xf32>
    %134 = vector.extract_strided_slice %133 {offsets = [0, 0], sizes = [2, 32], strides = [1, 1]} : vector<2x96xf32> to vector<2x32xf32>
    %135 = arith.negf %134 : vector<2x32xf32>
    %136 = math.exp %135 : vector<2x32xf32>
    %cst_44 = arith.constant 1.000000e+00 : f32
    %137 = vector.broadcast %cst_44 : f32 to vector<2x32xf32>
    %138 = arith.addf %137, %136 : vector<2x32xf32>
    %139 = arith.divf %137, %138 : vector<2x32xf32>
    %140 = vector.extract_strided_slice %133 {offsets = [0, 32], sizes = [2, 32], strides = [1, 1]} : vector<2x96xf32> to vector<2x32xf32>
    %141 = math.tanh %140 : vector<2x32xf32>
    %142 = vector.extract_strided_slice %133 {offsets = [0, 64], sizes = [2, 32], strides = [1, 1]} : vector<2x96xf32> to vector<2x32xf32>
    %143 = arith.negf %142 : vector<2x32xf32>
    %144 = math.exp %143 : vector<2x32xf32>
    %cst_45 = arith.constant 1.000000e+00 : f32
    %145 = vector.broadcast %cst_45 : f32 to vector<2x32xf32>
    %146 = arith.addf %145, %144 : vector<2x32xf32>
    %147 = arith.divf %145, %146 : vector<2x32xf32>
    %148 = arith.subf %120, %141 : vector<2x32xf32>
    %149 = arith.mulf %139, %148 : vector<2x32xf32>
    %150 = arith.addf %141, %149 : vector<2x32xf32>
    %151 = math.tanh %150 : vector<2x32xf32>
    %152 = arith.mulf %147, %151 : vector<2x32xf32>
    %153 = arith.index_cast %c4_i32 : i32 to index
    %c0_46 = arith.constant 0 : index
    %c0_47 = arith.constant 0 : index
    %154 = vector.load %arg6[%153, %c0_46, %c0_47] : memref<8x2x32xf32, #tpu.memory_space<vmem>>, vector<1x2x32xf32>
    %155 = vector.shape_cast %154 : vector<1x2x32xf32> to vector<2x32xf32>
    %156 = vector.shape_cast %152 : vector<2x32xf32> to vector<1x2x32xf32>
    tpu.vector_store %arg6[%153, %c0_46, %c0_47], %156 {strides = array<i32>} : memref<8x2x32xf32, #tpu.memory_space<vmem>>, vector<1x2x32xf32>,
    %c5_i32 = arith.constant 5 : i32
    %cst_48 = arith.constant dense<0.000000e+00> : vector<2x12xf32>
    %157 = tpu.matmul %152, %0, %cst_48 {dimension_numbers = #tpu.dot_dimension_numbers<[1], [0], [0], [1], [0, 0, 1, 1], [], []>} : vector<2x32xf32>, vector<32x12xf32>, vector<2x12xf32> -> vector<2x12xf32>
    %158 = arith.index_cast %c5_i32 : i32 to index
    %c0_49 = arith.constant 0 : index
    %c0_50 = arith.constant 0 : index
    %159 = vector.load %arg0[%158, %c0_49, %c0_50] : memref<8x2x12xf32, #tpu.memory_space<vmem>>, vector<1x2x12xf32>
    %160 = vector.shape_cast %159 : vector<1x2x12xf32> to vector<2x12xf32>
    %161 = arith.addf %157, %160 : vector<2x12xf32>
    %cst_51 = arith.constant dense<0.000000e+00> : vector<2x96xf32>
    %162 = tpu.matmul %161, %1, %cst_51 {dimension_numbers = #tpu.dot_dimension_numbers<[1], [0], [0], [1], [0, 0, 1, 1], [], []>} : vector<2x12xf32>, vector<12x96xf32>, vector<2x96xf32> -> vector<2x96xf32>
    %163 = arith.addf %162, %4 : vector<2x96xf32>
    %164 = vector.extract_strided_slice %163 {offsets = [0, 0], sizes = [2, 32], strides = [1, 1]} : vector<2x96xf32> to vector<2x32xf32>
    %165 = arith.negf %164 : vector<2x32xf32>
    %166 = math.exp %165 : vector<2x32xf32>
    %cst_52 = arith.constant 1.000000e+00 : f32
    %167 = vector.broadcast %cst_52 : f32 to vector<2x32xf32>
    %168 = arith.addf %167, %166 : vector<2x32xf32>
    %169 = arith.divf %167, %168 : vector<2x32xf32>
    %170 = vector.extract_strided_slice %163 {offsets = [0, 32], sizes = [2, 32], strides = [1, 1]} : vector<2x96xf32> to vector<2x32xf32>
    %171 = math.tanh %170 : vector<2x32xf32>
    %172 = vector.extract_strided_slice %163 {offsets = [0, 64], sizes = [2, 32], strides = [1, 1]} : vector<2x96xf32> to vector<2x32xf32>
    %173 = arith.negf %172 : vector<2x32xf32>
    %174 = math.exp %173 : vector<2x32xf32>
    %cst_53 = arith.constant 1.000000e+00 : f32
    %175 = vector.broadcast %cst_53 : f32 to vector<2x32xf32>
    %176 = arith.addf %175, %174 : vector<2x32xf32>
    %177 = arith.divf %175, %176 : vector<2x32xf32>
    %178 = arith.subf %150, %171 : vector<2x32xf32>
    %179 = arith.mulf %169, %178 : vector<2x32xf32>
    %180 = arith.addf %171, %179 : vector<2x32xf32>
    %181 = math.tanh %180 : vector<2x32xf32>
    %182 = arith.mulf %177, %181 : vector<2x32xf32>
    %183 = arith.index_cast %c5_i32 : i32 to index
    %c0_54 = arith.constant 0 : index
    %c0_55 = arith.constant 0 : index
    %184 = vector.load %arg6[%183, %c0_54, %c0_55] : memref<8x2x32xf32, #tpu.memory_space<vmem>>, vector<1x2x32xf32>
    %185 = vector.shape_cast %184 : vector<1x2x32xf32> to vector<2x32xf32>
    %186 = vector.shape_cast %182 : vector<2x32xf32> to vector<1x2x32xf32>
    tpu.vector_store %arg6[%183, %c0_54, %c0_55], %186 {strides = array<i32>} : memref<8x2x32xf32, #tpu.memory_space<vmem>>, vector<1x2x32xf32>,
    %c6_i32 = arith.constant 6 : i32
    %cst_56 = arith.constant dense<0.000000e+00> : vector<2x12xf32>
    %187 = tpu.matmul %182, %0, %cst_56 {dimension_numbers = #tpu.dot_dimension_numbers<[1], [0], [0], [1], [0, 0, 1, 1], [], []>} : vector<2x32xf32>, vector<32x12xf32>, vector<2x12xf32> -> vector<2x12xf32>
    %188 = arith.index_cast %c6_i32 : i32 to index
    %c0_57 = arith.constant 0 : index
    %c0_58 = arith.constant 0 : index
    %189 = vector.load %arg0[%188, %c0_57, %c0_58] : memref<8x2x12xf32, #tpu.memory_space<vmem>>, vector<1x2x12xf32>
    %190 = vector.shape_cast %189 : vector<1x2x12xf32> to vector<2x12xf32>
    %191 = arith.addf %187, %190 : vector<2x12xf32>
    %cst_59 = arith.constant dense<0.000000e+00> : vector<2x96xf32>
    %192 = tpu.matmul %191, %1, %cst_59 {dimension_numbers = #tpu.dot_dimension_numbers<[1], [0], [0], [1], [0, 0, 1, 1], [], []>} : vector<2x12xf32>, vector<12x96xf32>, vector<2x96xf32> -> vector<2x96xf32>
    %193 = arith.addf %192, %4 : vector<2x96xf32>
    %194 = vector.extract_strided_slice %193 {offsets = [0, 0], sizes = [2, 32], strides = [1, 1]} : vector<2x96xf32> to vector<2x32xf32>
    %195 = arith.negf %194 : vector<2x32xf32>
    %196 = math.exp %195 : vector<2x32xf32>
    %cst_60 = arith.constant 1.000000e+00 : f32
    %197 = vector.broadcast %cst_60 : f32 to vector<2x32xf32>
    %198 = arith.addf %197, %196 : vector<2x32xf32>
    %199 = arith.divf %197, %198 : vector<2x32xf32>
    %200 = vector.extract_strided_slice %193 {offsets = [0, 32], sizes = [2, 32], strides = [1, 1]} : vector<2x96xf32> to vector<2x32xf32>
    %201 = math.tanh %200 : vector<2x32xf32>
    %202 = vector.extract_strided_slice %193 {offsets = [0, 64], sizes = [2, 32], strides = [1, 1]} : vector<2x96xf32> to vector<2x32xf32>
    %203 = arith.negf %202 : vector<2x32xf32>
    %204 = math.exp %203 : vector<2x32xf32>
    %cst_61 = arith.constant 1.000000e+00 : f32
    %205 = vector.broadcast %cst_61 : f32 to vector<2x32xf32>
    %206 = arith.addf %205, %204 : vector<2x32xf32>
    %207 = arith.divf %205, %206 : vector<2x32xf32>
    %208 = arith.subf %180, %201 : vector<2x32xf32>
    %209 = arith.mulf %199, %208 : vector<2x32xf32>
    %210 = arith.addf %201, %209 : vector<2x32xf32>
    %211 = math.tanh %210 : vector<2x32xf32>
    %212 = arith.mulf %207, %211 : vector<2x32xf32>
    %213 = arith.index_cast %c6_i32 : i32 to index
    %c0_62 = arith.constant 0 : index
    %c0_63 = arith.constant 0 : index
    %214 = vector.load %arg6[%213, %c0_62, %c0_63] : memref<8x2x32xf32, #tpu.memory_space<vmem>>, vector<1x2x32xf32>
    %215 = vector.shape_cast %214 : vector<1x2x32xf32> to vector<2x32xf32>
    %216 = vector.shape_cast %212 : vector<2x32xf32> to vector<1x2x32xf32>
    tpu.vector_store %arg6[%213, %c0_62, %c0_63], %216 {strides = array<i32>} : memref<8x2x32xf32, #tpu.memory_space<vmem>>, vector<1x2x32xf32>,
    %c7_i32 = arith.constant 7 : i32
    %cst_64 = arith.constant dense<0.000000e+00> : vector<2x12xf32>
    %217 = tpu.matmul %212, %0, %cst_64 {dimension_numbers = #tpu.dot_dimension_numbers<[1], [0], [0], [1], [0, 0, 1, 1], [], []>} : vector<2x32xf32>, vector<32x12xf32>, vector<2x12xf32> -> vector<2x12xf32>
    %218 = arith.index_cast %c7_i32 : i32 to index
    %c0_65 = arith.constant 0 : index
    %c0_66 = arith.constant 0 : index
    %219 = vector.load %arg0[%218, %c0_65, %c0_66] : memref<8x2x12xf32, #tpu.memory_space<vmem>>, vector<1x2x12xf32>
    %220 = vector.shape_cast %219 : vector<1x2x12xf32> to vector<2x12xf32>
    %221 = arith.addf %217, %220 : vector<2x12xf32>
    %cst_67 = arith.constant dense<0.000000e+00> : vector<2x96xf32>
    %222 = tpu.matmul %221, %1, %cst_67 {dimension_numbers = #tpu.dot_dimension_numbers<[1], [0], [0], [1], [0, 0, 1, 1], [], []>} : vector<2x12xf32>, vector<12x96xf32>, vector<2x96xf32> -> vector<2x96xf32>
    %223 = arith.addf %222, %4 : vector<2x96xf32>
    %224 = vector.extract_strided_slice %223 {offsets = [0, 0], sizes = [2, 32], strides = [1, 1]} : vector<2x96xf32> to vector<2x32xf32>
    %225 = arith.negf %224 : vector<2x32xf32>
    %226 = math.exp %225 : vector<2x32xf32>
    %cst_68 = arith.constant 1.000000e+00 : f32
    %227 = vector.broadcast %cst_68 : f32 to vector<2x32xf32>
    %228 = arith.addf %227, %226 : vector<2x32xf32>
    %229 = arith.divf %227, %228 : vector<2x32xf32>
    %230 = vector.extract_strided_slice %223 {offsets = [0, 32], sizes = [2, 32], strides = [1, 1]} : vector<2x96xf32> to vector<2x32xf32>
    %231 = math.tanh %230 : vector<2x32xf32>
    %232 = vector.extract_strided_slice %223 {offsets = [0, 64], sizes = [2, 32], strides = [1, 1]} : vector<2x96xf32> to vector<2x32xf32>
    %233 = arith.negf %232 : vector<2x32xf32>
    %234 = math.exp %233 : vector<2x32xf32>
    %cst_69 = arith.constant 1.000000e+00 : f32
    %235 = vector.broadcast %cst_69 : f32 to vector<2x32xf32>
    %236 = arith.addf %235, %234 : vector<2x32xf32>
    %237 = arith.divf %235, %236 : vector<2x32xf32>
    %238 = arith.subf %210, %231 : vector<2x32xf32>
    %239 = arith.mulf %229, %238 : vector<2x32xf32>
    %240 = arith.addf %231, %239 : vector<2x32xf32>
    %241 = math.tanh %240 : vector<2x32xf32>
    %242 = arith.mulf %237, %241 : vector<2x32xf32>
    %243 = arith.index_cast %c7_i32 : i32 to index
    %c0_70 = arith.constant 0 : index
    %c0_71 = arith.constant 0 : index
    %244 = vector.load %arg6[%243, %c0_70, %c0_71] : memref<8x2x32xf32, #tpu.memory_space<vmem>>, vector<1x2x32xf32>
    %245 = vector.shape_cast %244 : vector<1x2x32xf32> to vector<2x32xf32>
    %246 = vector.shape_cast %242 : vector<2x32xf32> to vector<1x2x32xf32>
    tpu.vector_store %arg6[%243, %c0_70, %c0_71], %246 {strides = array<i32>} : memref<8x2x32xf32, #tpu.memory_space<vmem>>, vector<1x2x32xf32>,
    %c8_i32 = arith.constant 8 : i32
    %c0_72 = arith.constant 0 : index
    %c0_73 = arith.constant 0 : index
    %247 = vector.load %arg7[%c0_72, %c0_73] : memref<2x32xf32, #tpu.memory_space<vmem>>, vector<2x32xf32>
    tpu.vector_store %arg7[%c0_72, %c0_73], %242 {strides = array<i32>} : memref<2x32xf32, #tpu.memory_space<vmem>>, vector<2x32xf32>,
    %c0_74 = arith.constant 0 : index
    %c0_75 = arith.constant 0 : index
    %248 = vector.load %arg8[%c0_74, %c0_75] : memref<2x32xf32, #tpu.memory_space<vmem>>, vector<2x32xf32>
    tpu.vector_store %arg8[%c0_74, %c0_75], %240 {strides = array<i32>} : memref<2x32xf32, #tpu.memory_space<vmem>>, vector<2x32xf32>,
    return
  }
}

</mosaic_0001>

<llo_original>
// kernel: cifg_qlstm.1
$region0: #{cifg_qlstm.1}
  #allocation0 [shape = 'u32[]', space=smem, size = 0x4, offset = 0x4, fixed_abs, tag = 'smem constant byte address 0x4 - core index']
  #allocation1 [shape = 'u32[144,128]{1,0:T(1,128)}', space=vmem, size = 0x12000, scoped, tag = 'internal scratch']
  %s0 = inlined_call_operand.vmem [shape: f32[8,2,12], index: 0, kind: input, shape index: {}]
  %s1 = inlined_call_operand.vmem [shape: f32[2,32], index: 1, kind: input, shape index: {}]
  %s2 = inlined_call_operand.vmem [shape: f32[2,32], index: 2, kind: input, shape index: {}]
  %s3 = inlined_call_operand.vmem [shape: f32[32,12], index: 3, kind: input, shape index: {}]
  %s4 = inlined_call_operand.vmem [shape: f32[12,96], index: 4, kind: input, shape index: {}]
  %s5 = inlined_call_operand.vmem [shape: f32[1,96], index: 5, kind: input, shape index: {}]
  %s6 = inlined_call_operand.hbm [shape: f32[8,2,32], index: 6, kind: output, shape index: {0}]
  %s7 = inlined_call_operand.hbm [shape: f32[2,32], index: 7, kind: output, shape index: {1}]
  %s8 = inlined_call_operand.hbm [shape: f32[2,32], index: 8, kind: output, shape index: {2}]
  %9 = xla_tuple %s6, %s7, %s8
  %s10 = sld [smem:[#allocation0]]
  $region50: #{cifg_qlstm.1} parent=0
    _
  %s12 = ssub.s32 1, %s10
  %s13 = scalar_select 0, %s12, %s10
  $region1: #{cifg_qlstm.1} parent=0
    #allocation2 [shape = 'u8[8192]{0}', space=vmem, size = 0x2000, scoped, tag = 'output window, operand 0, single buffered']
    #allocation3 [shape = 's32[1]{0}', space=sflag, size = 0x4, scoped, tag = 'scoped memory for cifg_qlstm.1']
    #allocation4 [shape = 'u8[1024]{0}', space=vmem, size = 0x400, scoped, tag = 'output window, operand 1, single buffered']
    #allocation5 [shape = 's32[1]{0}', space=sflag, size = 0x4, scoped, tag = 'scoped memory for cifg_qlstm.1']
    #allocation6 [shape = 'u8[1024]{0}', space=vmem, size = 0x400, scoped, tag = 'output window, operand 2, single buffered']
    %14 = vsyncpa [#allocation3], 0
    %15 = vsyncpa [#allocation5], 0
    // Predicated region
    $region2: #{cifg_qlstm.1} parent=1 // pred_check
      _
    $region3: #{cifg_qlstm.1} parent=1 // pred_check_branch
      %17 = sbr.rel (0) target = $region5
    $region4: #{cifg_qlstm.1} parent=1 // pred_region
      _
    $region5: #{cifg_qlstm.1} parent=1 // pred_fallthru
      _
    // Predicated region
    $region6: #{cifg_qlstm.1} parent=1 // pred_check
      _
    $region7: #{cifg_qlstm.1} parent=1 // pred_check_branch
      %19 = sbr.rel (0) target = $region9
    $region8: #{cifg_qlstm.1} parent=1 // pred_region
      _
    $region9: #{cifg_qlstm.1} parent=1 // pred_fallthru
      _
    // Predicated region
    $region10: #{cifg_qlstm.1} parent=1 // pred_check
      _
    $region11: #{cifg_qlstm.1} parent=1 // pred_check_branch
      %21 = sbr.rel (0) target = $region13
    $region12: #{cifg_qlstm.1} parent=1 // pred_region
      _
    $region13: #{cifg_qlstm.1} parent=1 // pred_fallthru
      _
    // Predicated region
    $region14: #{cifg_qlstm.1} parent=1 // pred_check
      _
    $region15: #{cifg_qlstm.1} parent=1 // pred_check_branch
      %23 = sbr.rel (0) target = $region17
    $region16: #{cifg_qlstm.1} parent=1 // pred_region
      _
    $region17: #{cifg_qlstm.1} parent=1 // pred_fallthru
      _
    // Predicated region
    $region18: #{cifg_qlstm.1} parent=1 // pred_check
      _
    $region19: #{cifg_qlstm.1} parent=1 // pred_check_branch
      %25 = sbr.rel (0) target = $region21
    $region20: #{cifg_qlstm.1} parent=1 // pred_region
      _
    $region21: #{cifg_qlstm.1} parent=1 // pred_fallthru
      _
    // Predicated region
    $region22: #{cifg_qlstm.1} parent=1 // pred_check
      _
    $region23: #{cifg_qlstm.1} parent=1 // pred_check_branch
      %27 = sbr.rel (0) target = $region25
    $region24: #{cifg_qlstm.1} parent=1 // pred_region
      _
    $region25: #{cifg_qlstm.1} parent=1 // pred_fallthru
      _
    %v28 = vld [vmem:[%s3] sm:$0xff]
    %v29 = vld [vmem:[%s3 + $0x8] sm:$0xff]
    %v30 = vld [vmem:[%s3 + $0x10] sm:$0xff]
    %v31 = vld [vmem:[%s3 + $0x18] sm:$0xff]
    %v32 = vld [vmem:[%s4] sm:$0xff]
    %v33 = vld [vmem:[%s4 + $0x8] sm:$0xf]
    %v34 = vld [vmem:[%s5] sm:$0x1]
    %v36 = vlaneseq
    %v37 = vshrl.u32 %v36, 7
    %v38 = vsub.s32 0, %v37
    %v39 = vrot.slane %v34, %v38
    %v41 = vld [vmem:[%s1] sm:$0x3]
    %v42 = vld [vmem:[%s2] sm:$0x3]
    %v43 = vld [vmem:[%s0] sm:$0x3]
    %vm44 = vcmask 261120
    %v46 = vsel %vm44, %v41, 0
    %48 = vmatprep.subr.mxu0 0.0
    %49 = vmatpush1.msra.mxu0 0.0
    %50 = vmatprep.subr.mxu0 0.0
    %51 = vmatpush1.msra.mxu0 0.0
    %52 = vmatprep.subr.mxu0 0.0
    %53 = vmatpush1.msra.mxu0 0.0
    %54 = vmatprep.subr.mxu0 0.0
    %55 = vmatpush1.msra.mxu0 0.0
    %56 = vmatprep.subr.mxu0 0.0
    %57 = vmatpush1.msra.mxu0 0.0
    %58 = vmatprep.subr.mxu0 0.0
    %59 = vmatpush1.msra.mxu0 0.0
    %60 = vmatprep.subr.mxu0 0.0
    %61 = vmatpush1.msra.mxu0 0.0
    %62 = vmatprep.subr.mxu0 0.0
    %63 = vmatpush1.msra.mxu0 0.0
    %64 = vmatprep.subr.mxu0 0.0
    %65 = vmatpush1.msra.mxu0 0.0
    %66 = vmatprep.subr.mxu0 0.0
    %67 = vmatpush1.msra.mxu0 0.0
    %68 = vmatprep.subr.mxu0 0.0
    %69 = vmatpush1.msra.mxu0 0.0
    %70 = vmatprep.subr.mxu0 0.0
    %71 = vmatpush1.msra.mxu0 0.0
    %72 = vmatprep.subr.mxu0 0.0
    %73 = vmatpush1.msra.mxu0 %v31
    %74 = vmatprep.subr.mxu0 0.0
    %75 = vmatpush1.msra.mxu0 %v30
    %76 = vmatprep.subr.mxu0 0.0
    %77 = vmatpush1.msra.mxu0 %v29
    %78 = vmatprep.subr.mxu0 0.0
    %79 = vmatpush1.msra.mxu0 %v28
    %80 = vmatprep.subr.mxu0 0.0
    %81 = vmatpush2.msra.mxu0 0.0
    %82 = vmatprep.subr.mxu0 0.0
    %83 = vmatpush2.msra.mxu0 0.0
    %84 = vmatprep.subr.mxu0 0.0
    %85 = vmatpush2.msra.mxu0 0.0
    %86 = vmatprep.subr.mxu0 0.0
    %87 = vmatpush2.msra.mxu0 0.0
    %88 = vmatprep.subr.mxu0 0.0
    %89 = vmatpush2.msra.mxu0 0.0
    %90 = vmatprep.subr.mxu0 0.0
    %91 = vmatpush2.msra.mxu0 0.0
    %92 = vmatprep.subr.mxu0 0.0
    %93 = vmatpush2.msra.mxu0 0.0
    %94 = vmatprep.subr.mxu0 0.0
    %95 = vmatpush2.msra.mxu0 0.0
    %96 = vmatprep.subr.mxu0 0.0
    %97 = vmatpush2.msra.mxu0 0.0
    %98 = vmatprep.subr.mxu0 0.0
    %99 = vmatpush2.msra.mxu0 0.0
    %100 = vmatprep.subr.mxu0 0.0
    %101 = vmatpush2.msra.mxu0 0.0
    %102 = vmatprep.subr.mxu0 0.0
    %103 = vmatpush2.msra.mxu0 0.0
    %104 = vmatprep.subr.mxu0 0.0
    %105 = vmatpush2.msra.mxu0 0.0
    %106 = vmatprep.subr.mxu0 0.0
    %107 = vmatpush2.msra.mxu0 0.0
    %108 = vmatprep.subr.mxu0 0.0
    %109 = vmatpush2.msra.mxu0 0.0
    %110 = vmatprep.subr.mxu0 0.0
    %111 = vmatpush2.msra.mxu0 0.0
    %112 = vmatprep.mubr.f32.mxu0 0.0
    %113 = vmatmul.mubr.f32.gmra.mxu0 %v46
    %v114 = vpop.f32.mrf.mxu0
    %v115 = vadd.f32 %v43, %v114
    %v116 = vpop.f32.mrf.mxu0
    %117 = vdwg.mxu0
    %vm118 = vcmask 97280
    %v120 = vsel %vm118, %v115, 0
    %vm122 = vcmask 1043456
    %v124 = vsel %vm122, %v33, 0
    %126 = vmatprep.subr.mxu0 0.0
    %127 = vmatpush1.msra.mxu0 0.0
    %128 = vmatprep.subr.mxu0 0.0
    %129 = vmatpush1.msra.mxu0 0.0
    %130 = vmatprep.subr.mxu0 0.0
    %131 = vmatpush1.msra.mxu0 0.0
    %132 = vmatprep.subr.mxu0 0.0
    %133 = vmatpush1.msra.mxu0 0.0
    %134 = vmatprep.subr.mxu0 0.0
    %135 = vmatpush1.msra.mxu0 0.0
    %136 = vmatprep.subr.mxu0 0.0
    %137 = vmatpush1.msra.mxu0 0.0
    %138 = vmatprep.subr.mxu0 0.0
    %139 = vmatpush1.msra.mxu0 0.0
    %140 = vmatprep.subr.mxu0 0.0
    %141 = vmatpush1.msra.mxu0 0.0
    %142 = vmatprep.subr.mxu0 0.0
    %143 = vmatpush1.msra.mxu0 0.0
    %144 = vmatprep.subr.mxu0 0.0
    %145 = vmatpush1.msra.mxu0 0.0
    %146 = vmatprep.subr.mxu0 0.0
    %147 = vmatpush1.msra.mxu0 0.0
    %148 = vmatprep.subr.mxu0 0.0
    %149 = vmatpush1.msra.mxu0 0.0
    %150 = vmatprep.subr.mxu0 0.0
    %151 = vmatpush1.msra.mxu0 0.0
    %152 = vmatprep.subr.mxu0 0.0
    %153 = vmatpush1.msra.mxu0 0.0
    %154 = vmatprep.subr.mxu0 0.0
    %155 = vmatpush1.msra.mxu0 %v124
    %156 = vmatprep.subr.mxu0 0.0
    %157 = vmatpush1.msra.mxu0 %v32
    %158 = vmatprep.subr.mxu0 0.0
    %159 = vmatpush2.msra.mxu0 0.0
    %160 = vmatprep.subr.mxu0 0.0
    %161 = vmatpush2.msra.mxu0 0.0
    %162 = vmatprep.subr.mxu0 0.0
    %163 = vmatpush2.msra.mxu0 0.0
    %164 = vmatprep.subr.mxu0 0.0
    %165 = vmatpush2.msra.mxu0 0.0
    %166 = vmatprep.subr.mxu0 0.0
    %167 = vmatpush2.msra.mxu0 0.0
    %168 = vmatprep.subr.mxu0 0.0
    %169 = vmatpush2.msra.mxu0 0.0
    %170 = vmatprep.subr.mxu0 0.0
    %171 = vmatpush2.msra.mxu0 0.0
    %172 = vmatprep.subr.mxu0 0.0
    %173 = vmatpush2.msra.mxu0 0.0
    %174 = vmatprep.subr.mxu0 0.0
    %175 = vmatpush2.msra.mxu0 0.0
    %176 = vmatprep.subr.mxu0 0.0
    %177 = vmatpush2.msra.mxu0 0.0
    %178 = vmatprep.subr.mxu0 0.0
    %179 = vmatpush2.msra.mxu0 0.0
    %180 = vmatprep.subr.mxu0 0.0
    %181 = vmatpush2.msra.mxu0 0.0
    %182 = vmatprep.subr.mxu0 0.0
    %183 = vmatpush2.msra.mxu0 0.0
    %184 = vmatprep.subr.mxu0 0.0
    %185 = vmatpush2.msra.mxu0 0.0
    %186 = vmatprep.subr.mxu0 0.0
    %187 = vmatpush2.msra.mxu0 0.0
    %188 = vmatprep.subr.mxu0 0.0
    %189 = vmatpush2.msra.mxu0 0.0
    %190 = vmatprep.mubr.f32.mxu0 0.0
    %191 = vmatmul.mubr.f32.gmra.mxu0 %v120
    %v192 = vpop.f32.mrf.mxu0
    %v193 = vadd.f32 %v39, %v192
    %v194 = vpop.f32.mrf.mxu0
    %195 = vdwg.mxu0
    %v196 = vxor.u32 %v193, 2147483648
    %v197 = vmul.f32 %v196, 1.442695
    %v198 = vpow.pop %v197
    %v199 = vadd.f32 %v198, 1.0
    %v200 = vrcp.pop %v199
    %v201 = vmul.f32 1.0, %v200
    %v202 = vtanh.pop %v193
    %204 = vrot.lane.b32.xlu0 %v202, 96
    %v205 = vpop.permute.xlu0 %204
    %v207 = vsub.f32 %v42, %v205
    %v208 = vmul.f32 %v201, %v207
    %210 = vrot.lane.b32.xlu0 %v208, 32
    %v211 = vpop.permute.xlu0 %210
    %v213 = vadd.f32 %v202, %v211
    %v214 = vtanh.pop %v213
    %216 = vrot.lane.b32.xlu0 %v214, 32
    %v217 = vpop.permute.xlu0 %216
    %v219 = vmul.f32 %v201, %v217
    %221 = vrot.lane.b32.xlu0 %v219, 64
    %v222 = vpop.permute.xlu0 %221
    %vm224 = vcmask 254976
    %225 = vst.msk [vmem:[#allocation2] sm:$0x3] %vm224, %v222
    %s226 = scalar_lea.vmem %s0, 2
    %v227 = vld [vmem:[%s226] sm:$0x3]
    %v228 = vsel %vm44, %v222, 0
    %230 = vmatprep.subr.mxu0 0.0
    %231 = vmatpush1.msra.mxu0 0.0
    %232 = vmatprep.subr.mxu0 0.0
    %233 = vmatpush1.msra.mxu0 0.0
    %234 = vmatprep.subr.mxu0 0.0
    %235 = vmatpush1.msra.mxu0 0.0
    %236 = vmatprep.subr.mxu0 0.0
    %237 = vmatpush1.msra.mxu0 0.0
    %238 = vmatprep.subr.mxu0 0.0
    %239 = vmatpush1.msra.mxu0 0.0
    %240 = vmatprep.subr.mxu0 0.0
    %241 = vmatpush1.msra.mxu0 0.0
    %242 = vmatprep.subr.mxu0 0.0
    %243 = vmatpush1.msra.mxu0 0.0
    %244 = vmatprep.subr.mxu0 0.0
    %245 = vmatpush1.msra.mxu0 0.0
    %246 = vmatprep.subr.mxu0 0.0
    %247 = vmatpush1.msra.mxu0 0.0
    %248 = vmatprep.subr.mxu0 0.0
    %249 = vmatpush1.msra.mxu0 0.0
    %250 = vmatprep.subr.mxu0 0.0
    %251 = vmatpush1.msra.mxu0 0.0
    %252 = vmatprep.subr.mxu0 0.0
    %253 = vmatpush1.msra.mxu0 0.0
    %254 = vmatprep.subr.mxu0 0.0
    %255 = vmatpush1.msra.mxu0 %v31
    %256 = vmatprep.subr.mxu0 0.0
    %257 = vmatpush1.msra.mxu0 %v30
    %258 = vmatprep.subr.mxu0 0.0
    %259 = vmatpush1.msra.mxu0 %v29
    %260 = vmatprep.subr.mxu0 0.0
    %261 = vmatpush1.msra.mxu0 %v28
    %262 = vmatprep.subr.mxu0 0.0
    %263 = vmatpush2.msra.mxu0 0.0
    %264 = vmatprep.subr.mxu0 0.0
    %265 = vmatpush2.msra.mxu0 0.0
    %266 = vmatprep.subr.mxu0 0.0
    %267 = vmatpush2.msra.mxu0 0.0
    %268 = vmatprep.subr.mxu0 0.0
    %269 = vmatpush2.msra.mxu0 0.0
    %270 = vmatprep.subr.mxu0 0.0
    %271 = vmatpush2.msra.mxu0 0.0
    %272 = vmatprep.subr.mxu0 0.0
    %273 = vmatpush2.msra.mxu0 0.0
    %274 = vmatprep.subr.mxu0 0.0
    %275 = vmatpush2.msra.mxu0 0.0
    %276 = vmatprep.subr.mxu0 0.0
    %277 = vmatpush2.msra.mxu0 0.0
    %278 = vmatprep.subr.mxu0 0.0
    %279 = vmatpush2.msra.mxu0 0.0
    %280 = vmatprep.subr.mxu0 0.0
    %281 = vmatpush2.msra.mxu0 0.0
    %282 = vmatprep.subr.mxu0 0.0
    %283 = vmatpush2.msra.mxu0 0.0
    %284 = vmatprep.subr.mxu0 0.0
    %285 = vmatpush2.msra.mxu0 0.0
    %286 = vmatprep.subr.mxu0 0.0
    %287 = vmatpush2.msra.mxu0 0.0
    %288 = vmatprep.subr.mxu0 0.0
    %289 = vmatpush2.msra.mxu0 0.0
    %290 = vmatprep.subr.mxu0 0.0
    %291 = vmatpush2.msra.mxu0 0.0
    %292 = vmatprep.subr.mxu0 0.0
    %293 = vmatpush2.msra.mxu0 0.0
    %294 = vmatprep.mubr.f32.mxu0 0.0
    %295 = vmatmul.mubr.f32.gmra.mxu0 %v228
    %v296 = vpop.f32.mrf.mxu0
    %v297 = vadd.f32 %v227, %v296
    %v298 = vpop.f32.mrf.mxu0
    %299 = vdwg.mxu0
    %v301 = vsel %vm118, %v297, 0
    %303 = vmatprep.subr.mxu0 0.0
    %304 = vmatpush1.msra.mxu0 0.0
    %305 = vmatprep.subr.mxu0 0.0
    %306 = vmatpush1.msra.mxu0 0.0
    %307 = vmatprep.subr.mxu0 0.0
    %308 = vmatpush1.msra.mxu0 0.0
    %309 = vmatprep.subr.mxu0 0.0
    %310 = vmatpush1.msra.mxu0 0.0
    %311 = vmatprep.subr.mxu0 0.0
    %312 = vmatpush1.msra.mxu0 0.0
    %313 = vmatprep.subr.mxu0 0.0
    %314 = vmatpush1.msra.mxu0 0.0
    %315 = vmatprep.subr.mxu0 0.0
    %316 = vmatpush1.msra.mxu0 0.0
    %317 = vmatprep.subr.mxu0 0.0
    %318 = vmatpush1.msra.mxu0 0.0
    %319 = vmatprep.subr.mxu0 0.0
    %320 = vmatpush1.msra.mxu0 0.0
    %321 = vmatprep.subr.mxu0 0.0
    %322 = vmatpush1.msra.mxu0 0.0
    %323 = vmatprep.subr.mxu0 0.0
    %324 = vmatpush1.msra.mxu0 0.0
    %325 = vmatprep.subr.mxu0 0.0
    %326 = vmatpush1.msra.mxu0 0.0
    %327 = vmatprep.subr.mxu0 0.0
    %328 = vmatpush1.msra.mxu0 0.0
    %329 = vmatprep.subr.mxu0 0.0
    %330 = vmatpush1.msra.mxu0 0.0
    %331 = vmatprep.subr.mxu0 0.0
    %332 = vmatpush1.msra.mxu0 %v124
    %333 = vmatprep.subr.mxu0 0.0
    %334 = vmatpush1.msra.mxu0 %v32
    %335 = vmatprep.subr.mxu0 0.0
    %336 = vmatpush2.msra.mxu0 0.0
    %337 = vmatprep.subr.mxu0 0.0
    %338 = vmatpush2.msra.mxu0 0.0
    %339 = vmatprep.subr.mxu0 0.0
    %340 = vmatpush2.msra.mxu0 0.0
    %341 = vmatprep.subr.mxu0 0.0
    %342 = vmatpush2.msra.mxu0 0.0
    %343 = vmatprep.subr.mxu0 0.0
    %344 = vmatpush2.msra.mxu0 0.0
    %345 = vmatprep.subr.mxu0 0.0
    %346 = vmatpush2.msra.mxu0 0.0
    %347 = vmatprep.subr.mxu0 0.0
    %348 = vmatpush2.msra.mxu0 0.0
    %349 = vmatprep.subr.mxu0 0.0
    %350 = vmatpush2.msra.mxu0 0.0
    %351 = vmatprep.subr.mxu0 0.0
    %352 = vmatpush2.msra.mxu0 0.0
    %353 = vmatprep.subr.mxu0 0.0
    %354 = vmatpush2.msra.mxu0 0.0
    %355 = vmatprep.subr.mxu0 0.0
    %356 = vmatpush2.msra.mxu0 0.0
    %357 = vmatprep.subr.mxu0 0.0
    %358 = vmatpush2.msra.mxu0 0.0
    %359 = vmatprep.subr.mxu0 0.0
    %360 = vmatpush2.msra.mxu0 0.0
    %361 = vmatprep.subr.mxu0 0.0
    %362 = vmatpush2.msra.mxu0 0.0
    %363 = vmatprep.subr.mxu0 0.0
    %364 = vmatpush2.msra.mxu0 0.0
    %365 = vmatprep.subr.mxu0 0.0
    %366 = vmatpush2.msra.mxu0 0.0
    %367 = vmatprep.mubr.f32.mxu0 0.0
    %368 = vmatmul.mubr.f32.gmra.mxu0 %v301
    %v369 = vpop.f32.mrf.mxu0
    %v370 = vadd.f32 %v39, %v369
    %v371 = vpop.f32.mrf.mxu0
    %372 = vdwg.mxu0
    %v373 = vxor.u32 %v370, 2147483648
    %v374 = vmul.f32 %v373, 1.442695
    %v375 = vpow.pop %v374
    %v376 = vadd.f32 %v375, 1.0
    %v377 = vrcp.pop %v376
    %v378 = vmul.f32 1.0, %v377
    %v379 = vtanh.pop %v370
    %v380 = vsub.f32 %v213, %v379
    %382 = vrot.lane.b32.xlu0 %v380, 96
    %v383 = vpop.permute.xlu0 %382
    %v385 = vmul.f32 %v378, %v383
    %387 = vrot.lane.b32.xlu0 %v385, 32
    %v388 = vpop.permute.xlu0 %387
    %v390 = vadd.f32 %v379, %v388
    %v391 = vtanh.pop %v390
    %393 = vrot.lane.b32.xlu0 %v391, 32
    %v394 = vpop.permute.xlu0 %393
    %v396 = vmul.f32 %v378, %v394
    %398 = vrot.lane.b32.xlu0 %v396, 64
    %v399 = vpop.permute.xlu0 %398
    %s401 = scalar_lea.vmem [#allocation2], 2
    %402 = vst.msk [vmem:[%s401] sm:$0x3] %vm224, %v399
    %s403 = scalar_lea.vmem %s0, 4
    %v404 = vld [vmem:[%s403] sm:$0x3]
    %v405 = vsel %vm44, %v399, 0
    %407 = vmatprep.subr.mxu0 0.0
    %408 = vmatpush1.msra.mxu0 0.0
    %409 = vmatprep.subr.mxu0 0.0
    %410 = vmatpush1.msra.mxu0 0.0
    %411 = vmatprep.subr.mxu0 0.0
    %412 = vmatpush1.msra.mxu0 0.0
    %413 = vmatprep.subr.mxu0 0.0
    %414 = vmatpush1.msra.mxu0 0.0
    %415 = vmatprep.subr.mxu0 0.0
    %416 = vmatpush1.msra.mxu0 0.0
    %417 = vmatprep.subr.mxu0 0.0
    %418 = vmatpush1.msra.mxu0 0.0
    %419 = vmatprep.subr.mxu0 0.0
    %420 = vmatpush1.msra.mxu0 0.0
    %421 = vmatprep.subr.mxu0 0.0
    %422 = vmatpush1.msra.mxu0 0.0
    %423 = vmatprep.subr.mxu0 0.0
    %424 = vmatpush1.msra.mxu0 0.0
    %425 = vmatprep.subr.mxu0 0.0
    %426 = vmatpush1.msra.mxu0 0.0
    %427 = vmatprep.subr.mxu0 0.0
    %428 = vmatpush1.msra.mxu0 0.0
    %429 = vmatprep.subr.mxu0 0.0
    %430 = vmatpush1.msra.mxu0 0.0
    %431 = vmatprep.subr.mxu0 0.0
    %432 = vmatpush1.msra.mxu0 %v31
    %433 = vmatprep.subr.mxu0 0.0
    %434 = vmatpush1.msra.mxu0 %v30
    %435 = vmatprep.subr.mxu0 0.0
    %436 = vmatpush1.msra.mxu0 %v29
    %437 = vmatprep.subr.mxu0 0.0
    %438 = vmatpush1.msra.mxu0 %v28
    %439 = vmatprep.subr.mxu0 0.0
    %440 = vmatpush2.msra.mxu0 0.0
    %441 = vmatprep.subr.mxu0 0.0
    %442 = vmatpush2.msra.mxu0 0.0
    %443 = vmatprep.subr.mxu0 0.0
    %444 = vmatpush2.msra.mxu0 0.0
    %445 = vmatprep.subr.mxu0 0.0
    %446 = vmatpush2.msra.mxu0 0.0
    %447 = vmatprep.subr.mxu0 0.0
    %448 = vmatpush2.msra.mxu0 0.0
    %449 = vmatprep.subr.mxu0 0.0
    %450 = vmatpush2.msra.mxu0 0.0
    %451 = vmatprep.subr.mxu0 0.0
    %452 = vmatpush2.msra.mxu0 0.0
    %453 = vmatprep.subr.mxu0 0.0
    %454 = vmatpush2.msra.mxu0 0.0
    %455 = vmatprep.subr.mxu0 0.0
    %456 = vmatpush2.msra.mxu0 0.0
    %457 = vmatprep.subr.mxu0 0.0
    %458 = vmatpush2.msra.mxu0 0.0
    %459 = vmatprep.subr.mxu0 0.0
    %460 = vmatpush2.msra.mxu0 0.0
    %461 = vmatprep.subr.mxu0 0.0
    %462 = vmatpush2.msra.mxu0 0.0
    %463 = vmatprep.subr.mxu0 0.0
    %464 = vmatpush2.msra.mxu0 0.0
    %465 = vmatprep.subr.mxu0 0.0
    %466 = vmatpush2.msra.mxu0 0.0
    %467 = vmatprep.subr.mxu0 0.0
    %468 = vmatpush2.msra.mxu0 0.0
    %469 = vmatprep.subr.mxu0 0.0
    %470 = vmatpush2.msra.mxu0 0.0
    %471 = vmatprep.mubr.f32.mxu0 0.0
    %472 = vmatmul.mubr.f32.gmra.mxu0 %v405
    %v473 = vpop.f32.mrf.mxu0
    %v474 = vadd.f32 %v404, %v473
    %v475 = vpop.f32.mrf.mxu0
    %476 = vdwg.mxu0
    %v478 = vsel %vm118, %v474, 0
    %480 = vmatprep.subr.mxu0 0.0
    %481 = vmatpush1.msra.mxu0 0.0
    %482 = vmatprep.subr.mxu0 0.0
    %483 = vmatpush1.msra.mxu0 0.0
    %484 = vmatprep.subr.mxu0 0.0
    %485 = vmatpush1.msra.mxu0 0.0
    %486 = vmatprep.subr.mxu0 0.0
    %487 = vmatpush1.msra.mxu0 0.0
    %488 = vmatprep.subr.mxu0 0.0
    %489 = vmatpush1.msra.mxu0 0.0
    %490 = vmatprep.subr.mxu0 0.0
    %491 = vmatpush1.msra.mxu0 0.0
    %492 = vmatprep.subr.mxu0 0.0
    %493 = vmatpush1.msra.mxu0 0.0
    %494 = vmatprep.subr.mxu0 0.0
    %495 = vmatpush1.msra.mxu0 0.0
    %496 = vmatprep.subr.mxu0 0.0
    %497 = vmatpush1.msra.mxu0 0.0
    %498 = vmatprep.subr.mxu0 0.0
    %499 = vmatpush1.msra.mxu0 0.0
    %500 = vmatprep.subr.mxu0 0.0
    %501 = vmatpush1.msra.mxu0 0.0
    %502 = vmatprep.subr.mxu0 0.0
    %503 = vmatpush1.msra.mxu0 0.0
    %504 = vmatprep.subr.mxu0 0.0
    %505 = vmatpush1.msra.mxu0 0.0
    %506 = vmatprep.subr.mxu0 0.0
    %507 = vmatpush1.msra.mxu0 0.0
    %508 = vmatprep.subr.mxu0 0.0
    %509 = vmatpush1.msra.mxu0 %v124
    %510 = vmatprep.subr.mxu0 0.0
    %511 = vmatpush1.msra.mxu0 %v32
    %512 = vmatprep.subr.mxu0 0.0
    %513 = vmatpush2.msra.mxu0 0.0
    %514 = vmatprep.subr.mxu0 0.0
    %515 = vmatpush2.msra.mxu0 0.0
    %516 = vmatprep.subr.mxu0 0.0
    %517 = vmatpush2.msra.mxu0 0.0
    %518 = vmatprep.subr.mxu0 0.0
    %519 = vmatpush2.msra.mxu0 0.0
    %520 = vmatprep.subr.mxu0 0.0
    %521 = vmatpush2.msra.mxu0 0.0
    %522 = vmatprep.subr.mxu0 0.0
    %523 = vmatpush2.msra.mxu0 0.0
    %524 = vmatprep.subr.mxu0 0.0
    %525 = vmatpush2.msra.mxu0 0.0
    %526 = vmatprep.subr.mxu0 0.0
    %527 = vmatpush2.msra.mxu0 0.0
    %528 = vmatprep.subr.mxu0 0.0
    %529 = vmatpush2.msra.mxu0 0.0
    %530 = vmatprep.subr.mxu0 0.0
    %531 = vmatpush2.msra.mxu0 0.0
    %532 = vmatprep.subr.mxu0 0.0
    %533 = vmatpush2.msra.mxu0 0.0
    %534 = vmatprep.subr.mxu0 0.0
    %535 = vmatpush2.msra.mxu0 0.0
    %536 = vmatprep.subr.mxu0 0.0
    %537 = vmatpush2.msra.mxu0 0.0
    %538 = vmatprep.subr.mxu0 0.0
    %539 = vmatpush2.msra.mxu0 0.0
    %540 = vmatprep.subr.mxu0 0.0
    %541 = vmatpush2.msra.mxu0 0.0
    %542 = vmatprep.subr.mxu0 0.0
    %543 = vmatpush2.msra.mxu0 0.0
    %544 = vmatprep.mubr.f32.mxu0 0.0
    %545 = vmatmul.mubr.f32.gmra.mxu0 %v478
    %v546 = vpop.f32.mrf.mxu0
    %v547 = vadd.f32 %v39, %v546
    %v548 = vpop.f32.mrf.mxu0
    %549 = vdwg.mxu0
    %v550 = vxor.u32 %v547, 2147483648
    %v551 = vmul.f32 %v550, 1.442695
    %v552 = vpow.pop %v551
    %v553 = vadd.f32 %v552, 1.0
    %v554 = vrcp.pop %v553
    %v555 = vmul.f32 1.0, %v554
    %v556 = vtanh.pop %v547
    %v557 = vsub.f32 %v390, %v556
    %559 = vrot.lane.b32.xlu0 %v557, 96
    %v560 = vpop.permute.xlu0 %559
    %v562 = vmul.f32 %v555, %v560
    %564 = vrot.lane.b32.xlu0 %v562, 32
    %v565 = vpop.permute.xlu0 %564
    %v567 = vadd.f32 %v556, %v565
    %v568 = vtanh.pop %v567
    %570 = vrot.lane.b32.xlu0 %v568, 32
    %v571 = vpop.permute.xlu0 %570
    %v573 = vmul.f32 %v555, %v571
    %575 = vrot.lane.b32.xlu0 %v573, 64
    %v576 = vpop.permute.xlu0 %575
    %s578 = scalar_lea.vmem [#allocation2], 4
    %579 = vst.msk [vmem:[%s578] sm:$0x3] %vm224, %v576
    %s580 = scalar_lea.vmem %s0, 6
    %v581 = vld [vmem:[%s580] sm:$0x3]
    %v582 = vsel %vm44, %v576, 0
    %584 = vmatprep.subr.mxu0 0.0
    %585 = vmatpush1.msra.mxu0 0.0
    %586 = vmatprep.subr.mxu0 0.0
    %587 = vmatpush1.msra.mxu0 0.0
    %588 = vmatprep.subr.mxu0 0.0
    %589 = vmatpush1.msra.mxu0 0.0
    %590 = vmatprep.subr.mxu0 0.0
    %591 = vmatpush1.msra.mxu0 0.0
    %592 = vmatprep.subr.mxu0 0.0
    %593 = vmatpush1.msra.mxu0 0.0
    %594 = vmatprep.subr.mxu0 0.0
    %595 = vmatpush1.msra.mxu0 0.0
    %596 = vmatprep.subr.mxu0 0.0
    %597 = vmatpush1.msra.mxu0 0.0
    %598 = vmatprep.subr.mxu0 0.0
    %599 = vmatpush1.msra.mxu0 0.0
    %600 = vmatprep.subr.mxu0 0.0
    %601 = vmatpush1.msra.mxu0 0.0
    %602 = vmatprep.subr.mxu0 0.0
    %603 = vmatpush1.msra.mxu0 0.0
    %604 = vmatprep.subr.mxu0 0.0
    %605 = vmatpush1.msra.mxu0 0.0
    %606 = vmatprep.subr.mxu0 0.0
    %607 = vmatpush1.msra.mxu0 0.0
    %608 = vmatprep.subr.mxu0 0.0
    %609 = vmatpush1.msra.mxu0 %v31
    %610 = vmatprep.subr.mxu0 0.0
    %611 = vmatpush1.msra.mxu0 %v30
    %612 = vmatprep.subr.mxu0 0.0
    %613 = vmatpush1.msra.mxu0 %v29
    %614 = vmatprep.subr.mxu0 0.0
    %615 = vmatpush1.msra.mxu0 %v28
    %616 = vmatprep.subr.mxu0 0.0
    %617 = vmatpush2.msra.mxu0 0.0
    %618 = vmatprep.subr.mxu0 0.0
    %619 = vmatpush2.msra.mxu0 0.0
    %620 = vmatprep.subr.mxu0 0.0
    %621 = vmatpush2.msra.mxu0 0.0
    %622 = vmatprep.subr.mxu0 0.0
    %623 = vmatpush2.msra.mxu0 0.0
    %624 = vmatprep.subr.mxu0 0.0
    %625 = vmatpush2.msra.mxu0 0.0
    %626 = vmatprep.subr.mxu0 0.0
    %627 = vmatpush2.msra.mxu0 0.0
    %628 = vmatprep.subr.mxu0 0.0
    %629 = vmatpush2.msra.mxu0 0.0
    %630 = vmatprep.subr.mxu0 0.0
    %631 = vmatpush2.msra.mxu0 0.0
    %632 = vmatprep.subr.mxu0 0.0
    %633 = vmatpush2.msra.mxu0 0.0
    %634 = vmatprep.subr.mxu0 0.0
    %635 = vmatpush2.msra.mxu0 0.0
    %636 = vmatprep.subr.mxu0 0.0
    %637 = vmatpush2.msra.mxu0 0.0
    %638 = vmatprep.subr.mxu0 0.0
    %639 = vmatpush2.msra.mxu0 0.0
    %640 = vmatprep.subr.mxu0 0.0
    %641 = vmatpush2.msra.mxu0 0.0
    %642 = vmatprep.subr.mxu0 0.0
    %643 = vmatpush2.msra.mxu0 0.0
    %644 = vmatprep.subr.mxu0 0.0
    %645 = vmatpush2.msra.mxu0 0.0
    %646 = vmatprep.subr.mxu0 0.0
    %647 = vmatpush2.msra.mxu0 0.0
    %648 = vmatprep.mubr.f32.mxu0 0.0
    %649 = vmatmul.mubr.f32.gmra.mxu0 %v582
    %v650 = vpop.f32.mrf.mxu0
    %v651 = vadd.f32 %v581, %v650
    %v652 = vpop.f32.mrf.mxu0
    %653 = vdwg.mxu0
    %v655 = vsel %vm118, %v651, 0
    %657 = vmatprep.subr.mxu0 0.0
    %658 = vmatpush1.msra.mxu0 0.0
    %659 = vmatprep.subr.mxu0 0.0
    %660 = vmatpush1.msra.mxu0 0.0
    %661 = vmatprep.subr.mxu0 0.0
    %662 = vmatpush1.msra.mxu0 0.0
    %663 = vmatprep.subr.mxu0 0.0
    %664 = vmatpush1.msra.mxu0 0.0
    %665 = vmatprep.subr.mxu0 0.0
    %666 = vmatpush1.msra.mxu0 0.0
    %667 = vmatprep.subr.mxu0 0.0
    %668 = vmatpush1.msra.mxu0 0.0
    %669 = vmatprep.subr.mxu0 0.0
    %670 = vmatpush1.msra.mxu0 0.0
    %671 = vmatprep.subr.mxu0 0.0
    %672 = vmatpush1.msra.mxu0 0.0
    %673 = vmatprep.subr.mxu0 0.0
    %674 = vmatpush1.msra.mxu0 0.0
    %675 = vmatprep.subr.mxu0 0.0
    %676 = vmatpush1.msra.mxu0 0.0
    %677 = vmatprep.subr.mxu0 0.0
    %678 = vmatpush1.msra.mxu0 0.0
    %679 = vmatprep.subr.mxu0 0.0
    %680 = vmatpush1.msra.mxu0 0.0
    %681 = vmatprep.subr.mxu0 0.0
    %682 = vmatpush1.msra.mxu0 0.0
    %683 = vmatprep.subr.mxu0 0.0
    %684 = vmatpush1.msra.mxu0 0.0
    %685 = vmatprep.subr.mxu0 0.0
    %686 = vmatpush1.msra.mxu0 %v124
    %687 = vmatprep.subr.mxu0 0.0
    %688 = vmatpush1.msra.mxu0 %v32
    %689 = vmatprep.subr.mxu0 0.0
    %690 = vmatpush2.msra.mxu0 0.0
    %691 = vmatprep.subr.mxu0 0.0
    %692 = vmatpush2.msra.mxu0 0.0
    %693 = vmatprep.subr.mxu0 0.0
    %694 = vmatpush2.msra.mxu0 0.0
    %695 = vmatprep.subr.mxu0 0.0
    %696 = vmatpush2.msra.mxu0 0.0
    %697 = vmatprep.subr.mxu0 0.0
    %698 = vmatpush2.msra.mxu0 0.0
    %699 = vmatprep.subr.mxu0 0.0
    %700 = vmatpush2.msra.mxu0 0.0
    %701 = vmatprep.subr.mxu0 0.0
    %702 = vmatpush2.msra.mxu0 0.0
    %703 = vmatprep.subr.mxu0 0.0
    %704 = vmatpush2.msra.mxu0 0.0
    %705 = vmatprep.subr.mxu0 0.0
    %706 = vmatpush2.msra.mxu0 0.0
    %707 = vmatprep.subr.mxu0 0.0
    %708 = vmatpush2.msra.mxu0 0.0
    %709 = vmatprep.subr.mxu0 0.0
    %710 = vmatpush2.msra.mxu0 0.0
    %711 = vmatprep.subr.mxu0 0.0
    %712 = vmatpush2.msra.mxu0 0.0
    %713 = vmatprep.subr.mxu0 0.0
    %714 = vmatpush2.msra.mxu0 0.0
    %715 = vmatprep.subr.mxu0 0.0
    %716 = vmatpush2.msra.mxu0 0.0
    %717 = vmatprep.subr.mxu0 0.0
    %718 = vmatpush2.msra.mxu0 0.0
    %719 = vmatprep.subr.mxu0 0.0
    %720 = vmatpush2.msra.mxu0 0.0
    %721 = vmatprep.mubr.f32.mxu0 0.0
    %722 = vmatmul.mubr.f32.gmra.mxu0 %v655
    %v723 = vpop.f32.mrf.mxu0
    %v724 = vadd.f32 %v39, %v723
    %v725 = vpop.f32.mrf.mxu0
    %726 = vdwg.mxu0
    %v727 = vxor.u32 %v724, 2147483648
    %v728 = vmul.f32 %v727, 1.442695
    %v729 = vpow.pop %v728
    %v730 = vadd.f32 %v729, 1.0
    %v731 = vrcp.pop %v730
    %v732 = vmul.f32 1.0, %v731
    %v733 = vtanh.pop %v724
    %v734 = vsub.f32 %v567, %v733
    %736 = vrot.lane.b32.xlu0 %v734, 96
    %v737 = vpop.permute.xlu0 %736
    %v739 = vmul.f32 %v732, %v737
    %741 = vrot.lane.b32.xlu0 %v739, 32
    %v742 = vpop.permute.xlu0 %741
    %v744 = vadd.f32 %v733, %v742
    %v745 = vtanh.pop %v744
    %747 = vrot.lane.b32.xlu0 %v745, 32
    %v748 = vpop.permute.xlu0 %747
    %v750 = vmul.f32 %v732, %v748
    %752 = vrot.lane.b32.xlu0 %v750, 64
    %v753 = vpop.permute.xlu0 %752
    %s755 = scalar_lea.vmem [#allocation2], 6
    %756 = vst.msk [vmem:[%s755] sm:$0x3] %vm224, %v753
    %s757 = scalar_lea.vmem %s0, 8
    %v758 = vld [vmem:[%s757] sm:$0x3]
    %v759 = vsel %vm44, %v753, 0
    %761 = vmatprep.subr.mxu0 0.0
    %762 = vmatpush1.msra.mxu0 0.0
    %763 = vmatprep.subr.mxu0 0.0
    %764 = vmatpush1.msra.mxu0 0.0
    %765 = vmatprep.subr.mxu0 0.0
    %766 = vmatpush1.msra.mxu0 0.0
    %767 = vmatprep.subr.mxu0 0.0
    %768 = vmatpush1.msra.mxu0 0.0
    %769 = vmatprep.subr.mxu0 0.0
    %770 = vmatpush1.msra.mxu0 0.0
    %771 = vmatprep.subr.mxu0 0.0
    %772 = vmatpush1.msra.mxu0 0.0
    %773 = vmatprep.subr.mxu0 0.0
    %774 = vmatpush1.msra.mxu0 0.0
    %775 = vmatprep.subr.mxu0 0.0
    %776 = vmatpush1.msra.mxu0 0.0
    %777 = vmatprep.subr.mxu0 0.0
    %778 = vmatpush1.msra.mxu0 0.0
    %779 = vmatprep.subr.mxu0 0.0
    %780 = vmatpush1.msra.mxu0 0.0
    %781 = vmatprep.subr.mxu0 0.0
    %782 = vmatpush1.msra.mxu0 0.0
    %783 = vmatprep.subr.mxu0 0.0
    %784 = vmatpush1.msra.mxu0 0.0
    %785 = vmatprep.subr.mxu0 0.0
    %786 = vmatpush1.msra.mxu0 %v31
    %787 = vmatprep.subr.mxu0 0.0
    %788 = vmatpush1.msra.mxu0 %v30
    %789 = vmatprep.subr.mxu0 0.0
    %790 = vmatpush1.msra.mxu0 %v29
    %791 = vmatprep.subr.mxu0 0.0
    %792 = vmatpush1.msra.mxu0 %v28
    %793 = vmatprep.subr.mxu0 0.0
    %794 = vmatpush2.msra.mxu0 0.0
    %795 = vmatprep.subr.mxu0 0.0
    %796 = vmatpush2.msra.mxu0 0.0
    %797 = vmatprep.subr.mxu0 0.0
    %798 = vmatpush2.msra.mxu0 0.0
    %799 = vmatprep.subr.mxu0 0.0
    %800 = vmatpush2.msra.mxu0 0.0
    %801 = vmatprep.subr.mxu0 0.0
    %802 = vmatpush2.msra.mxu0 0.0
    %803 = vmatprep.subr.mxu0 0.0
    %804 = vmatpush2.msra.mxu0 0.0
    %805 = vmatprep.subr.mxu0 0.0
    %806 = vmatpush2.msra.mxu0 0.0
    %807 = vmatprep.subr.mxu0 0.0
    %808 = vmatpush2.msra.mxu0 0.0
    %809 = vmatprep.subr.mxu0 0.0
    %810 = vmatpush2.msra.mxu0 0.0
    %811 = vmatprep.subr.mxu0 0.0
    %812 = vmatpush2.msra.mxu0 0.0
    %813 = vmatprep.subr.mxu0 0.0
    %814 = vmatpush2.msra.mxu0 0.0
    %815 = vmatprep.subr.mxu0 0.0
    %816 = vmatpush2.msra.mxu0 0.0
    %817 = vmatprep.subr.mxu0 0.0
    %818 = vmatpush2.msra.mxu0 0.0
    %819 = vmatprep.subr.mxu0 0.0
    %820 = vmatpush2.msra.mxu0 0.0
    %821 = vmatprep.subr.mxu0 0.0
    %822 = vmatpush2.msra.mxu0 0.0
    %823 = vmatprep.subr.mxu0 0.0
    %824 = vmatpush2.msra.mxu0 0.0
    %825 = vmatprep.mubr.f32.mxu0 0.0
    %826 = vmatmul.mubr.f32.gmra.mxu0 %v759
    %v827 = vpop.f32.mrf.mxu0
    %v828 = vadd.f32 %v758, %v827
    %v829 = vpop.f32.mrf.mxu0
    %830 = vdwg.mxu0
    %v832 = vsel %vm118, %v828, 0
    %834 = vmatprep.subr.mxu0 0.0
    %835 = vmatpush1.msra.mxu0 0.0
    %836 = vmatprep.subr.mxu0 0.0
    %837 = vmatpush1.msra.mxu0 0.0
    %838 = vmatprep.subr.mxu0 0.0
    %839 = vmatpush1.msra.mxu0 0.0
    %840 = vmatprep.subr.mxu0 0.0
    %841 = vmatpush1.msra.mxu0 0.0
    %842 = vmatprep.subr.mxu0 0.0
    %843 = vmatpush1.msra.mxu0 0.0
    %844 = vmatprep.subr.mxu0 0.0
    %845 = vmatpush1.msra.mxu0 0.0
    %846 = vmatprep.subr.mxu0 0.0
    %847 = vmatpush1.msra.mxu0 0.0
    %848 = vmatprep.subr.mxu0 0.0
    %849 = vmatpush1.msra.mxu0 0.0
    %850 = vmatprep.subr.mxu0 0.0
    %851 = vmatpush1.msra.mxu0 0.0
    %852 = vmatprep.subr.mxu0 0.0
    %853 = vmatpush1.msra.mxu0 0.0
    %854 = vmatprep.subr.mxu0 0.0
    %855 = vmatpush1.msra.mxu0 0.0
    %856 = vmatprep.subr.mxu0 0.0
    %857 = vmatpush1.msra.mxu0 0.0
    %858 = vmatprep.subr.mxu0 0.0
    %859 = vmatpush1.msra.mxu0 0.0
    %860 = vmatprep.subr.mxu0 0.0
    %861 = vmatpush1.msra.mxu0 0.0
    %862 = vmatprep.subr.mxu0 0.0
    %863 = vmatpush1.msra.mxu0 %v124
    %864 = vmatprep.subr.mxu0 0.0
    %865 = vmatpush1.msra.mxu0 %v32
    %866 = vmatprep.subr.mxu0 0.0
    %867 = vmatpush2.msra.mxu0 0.0
    %868 = vmatprep.subr.mxu0 0.0
    %869 = vmatpush2.msra.mxu0 0.0
    %870 = vmatprep.subr.mxu0 0.0
    %871 = vmatpush2.msra.mxu0 0.0
    %872 = vmatprep.subr.mxu0 0.0
    %873 = vmatpush2.msra.mxu0 0.0
    %874 = vmatprep.subr.mxu0 0.0
    %875 = vmatpush2.msra.mxu0 0.0
    %876 = vmatprep.subr.mxu0 0.0
    %877 = vmatpush2.msra.mxu0 0.0
    %878 = vmatprep.subr.mxu0 0.0
    %879 = vmatpush2.msra.mxu0 0.0
    %880 = vmatprep.subr.mxu0 0.0
    %881 = vmatpush2.msra.mxu0 0.0
    %882 = vmatprep.subr.mxu0 0.0
    %883 = vmatpush2.msra.mxu0 0.0
    %884 = vmatprep.subr.mxu0 0.0
    %885 = vmatpush2.msra.mxu0 0.0
    %886 = vmatprep.subr.mxu0 0.0
    %887 = vmatpush2.msra.mxu0 0.0
    %888 = vmatprep.subr.mxu0 0.0
    %889 = vmatpush2.msra.mxu0 0.0
    %890 = vmatprep.subr.mxu0 0.0
    %891 = vmatpush2.msra.mxu0 0.0
    %892 = vmatprep.subr.mxu0 0.0
    %893 = vmatpush2.msra.mxu0 0.0
    %894 = vmatprep.subr.mxu0 0.0
    %895 = vmatpush2.msra.mxu0 0.0
    %896 = vmatprep.subr.mxu0 0.0
    %897 = vmatpush2.msra.mxu0 0.0
    %898 = vmatprep.mubr.f32.mxu0 0.0
    %899 = vmatmul.mubr.f32.gmra.mxu0 %v832
    %v900 = vpop.f32.mrf.mxu0
    %v901 = vadd.f32 %v39, %v900
    %v902 = vpop.f32.mrf.mxu0
    %903 = vdwg.mxu0
    %v904 = vxor.u32 %v901, 2147483648
    %v905 = vmul.f32 %v904, 1.442695
    %v906 = vpow.pop %v905
    %v907 = vadd.f32 %v906, 1.0
    %v908 = vrcp.pop %v907
    %v909 = vmul.f32 1.0, %v908
    %v910 = vtanh.pop %v901
    %v911 = vsub.f32 %v744, %v910
    %913 = vrot.lane.b32.xlu0 %v911, 96
    %v914 = vpop.permute.xlu0 %913
    %v916 = vmul.f32 %v909, %v914
    %918 = vrot.lane.b32.xlu0 %v916, 32
    %v919 = vpop.permute.xlu0 %918
    %v921 = vadd.f32 %v910, %v919
    %v922 = vtanh.pop %v921
    %924 = vrot.lane.b32.xlu0 %v922, 32
    %v925 = vpop.permute.xlu0 %924
    %v927 = vmul.f32 %v909, %v925
    %929 = vrot.lane.b32.xlu0 %v927, 64
    %v930 = vpop.permute.xlu0 %929
    %s932 = scalar_lea.vmem [#allocation2], 8
    %933 = vst.msk [vmem:[%s932] sm:$0x3] %vm224, %v930
    %s934 = scalar_lea.vmem %s0, 10
    %v935 = vld [vmem:[%s934] sm:$0x3]
    %v936 = vsel %vm44, %v930, 0
    %938 = vmatprep.subr.mxu0 0.0
    %939 = vmatpush1.msra.mxu0 0.0
    %940 = vmatprep.subr.mxu0 0.0
    %941 = vmatpush1.msra.mxu0 0.0
    %942 = vmatprep.subr.mxu0 0.0
    %943 = vmatpush1.msra.mxu0 0.0
    %944 = vmatprep.subr.mxu0 0.0
    %945 = vmatpush1.msra.mxu0 0.0
    %946 = vmatprep.subr.mxu0 0.0
    %947 = vmatpush1.msra.mxu0 0.0
    %948 = vmatprep.subr.mxu0 0.0
    %949 = vmatpush1.msra.mxu0 0.0
    %950 = vmatprep.subr.mxu0 0.0
    %951 = vmatpush1.msra.mxu0 0.0
    %952 = vmatprep.subr.mxu0 0.0
    %953 = vmatpush1.msra.mxu0 0.0
    %954 = vmatprep.subr.mxu0 0.0
    %955 = vmatpush1.msra.mxu0 0.0
    %956 = vmatprep.subr.mxu0 0.0
    %957 = vmatpush1.msra.mxu0 0.0
    %958 = vmatprep.subr.mxu0 0.0
    %959 = vmatpush1.msra.mxu0 0.0
    %960 = vmatprep.subr.mxu0 0.0
    %961 = vmatpush1.msra.mxu0 0.0
    %962 = vmatprep.subr.mxu0 0.0
    %963 = vmatpush1.msra.mxu0 %v31
    %964 = vmatprep.subr.mxu0 0.0
    %965 = vmatpush1.msra.mxu0 %v30
    %966 = vmatprep.subr.mxu0 0.0
    %967 = vmatpush1.msra.mxu0 %v29
    %968 = vmatprep.subr.mxu0 0.0
    %969 = vmatpush1.msra.mxu0 %v28
    %970 = vmatprep.subr.mxu0 0.0
    %971 = vmatpush2.msra.mxu0 0.0
    %972 = vmatprep.subr.mxu0 0.0
    %973 = vmatpush2.msra.mxu0 0.0
    %974 = vmatprep.subr.mxu0 0.0
    %975 = vmatpush2.msra.mxu0 0.0
    %976 = vmatprep.subr.mxu0 0.0
    %977 = vmatpush2.msra.mxu0 0.0
    %978 = vmatprep.subr.mxu0 0.0
    %979 = vmatpush2.msra.mxu0 0.0
    %980 = vmatprep.subr.mxu0 0.0
    %981 = vmatpush2.msra.mxu0 0.0
    %982 = vmatprep.subr.mxu0 0.0
    %983 = vmatpush2.msra.mxu0 0.0
    %984 = vmatprep.subr.mxu0 0.0
    %985 = vmatpush2.msra.mxu0 0.0
    %986 = vmatprep.subr.mxu0 0.0
    %987 = vmatpush2.msra.mxu0 0.0
    %988 = vmatprep.subr.mxu0 0.0
    %989 = vmatpush2.msra.mxu0 0.0
    %990 = vmatprep.subr.mxu0 0.0
    %991 = vmatpush2.msra.mxu0 0.0
    %992 = vmatprep.subr.mxu0 0.0
    %993 = vmatpush2.msra.mxu0 0.0
    %994 = vmatprep.subr.mxu0 0.0
    %995 = vmatpush2.msra.mxu0 0.0
    %996 = vmatprep.subr.mxu0 0.0
    %997 = vmatpush2.msra.mxu0 0.0
    %998 = vmatprep.subr.mxu0 0.0
    %999 = vmatpush2.msra.mxu0 0.0
    %1000 = vmatprep.subr.mxu0 0.0
    %1001 = vmatpush2.msra.mxu0 0.0
    %1002 = vmatprep.mubr.f32.mxu0 0.0
    %1003 = vmatmul.mubr.f32.gmra.mxu0 %v936
    %v1004 = vpop.f32.mrf.mxu0
    %v1005 = vadd.f32 %v935, %v1004
    %v1006 = vpop.f32.mrf.mxu0
    %1007 = vdwg.mxu0
    %v1009 = vsel %vm118, %v1005, 0
    %1011 = vmatprep.subr.mxu0 0.0
    %1012 = vmatpush1.msra.mxu0 0.0
    %1013 = vmatprep.subr.mxu0 0.0
    %1014 = vmatpush1.msra.mxu0 0.0
    %1015 = vmatprep.subr.mxu0 0.0
    %1016 = vmatpush1.msra.mxu0 0.0
    %1017 = vmatprep.subr.mxu0 0.0
    %1018 = vmatpush1.msra.mxu0 0.0
    %1019 = vmatprep.subr.mxu0 0.0
    %1020 = vmatpush1.msra.mxu0 0.0
    %1021 = vmatprep.subr.mxu0 0.0
    %1022 = vmatpush1.msra.mxu0 0.0
    %1023 = vmatprep.subr.mxu0 0.0
    %1024 = vmatpush1.msra.mxu0 0.0
    %1025 = vmatprep.subr.mxu0 0.0
    %1026 = vmatpush1.msra.mxu0 0.0
    %1027 = vmatprep.subr.mxu0 0.0
    %1028 = vmatpush1.msra.mxu0 0.0
    %1029 = vmatprep.subr.mxu0 0.0
    %1030 = vmatpush1.msra.mxu0 0.0
    %1031 = vmatprep.subr.mxu0 0.0
    %1032 = vmatpush1.msra.mxu0 0.0
    %1033 = vmatprep.subr.mxu0 0.0
    %1034 = vmatpush1.msra.mxu0 0.0
    %1035 = vmatprep.subr.mxu0 0.0
    %1036 = vmatpush1.msra.mxu0 0.0
    %1037 = vmatprep.subr.mxu0 0.0
    %1038 = vmatpush1.msra.mxu0 0.0
    %1039 = vmatprep.subr.mxu0 0.0
    %1040 = vmatpush1.msra.mxu0 %v124
    %1041 = vmatprep.subr.mxu0 0.0
    %1042 = vmatpush1.msra.mxu0 %v32
    %1043 = vmatprep.subr.mxu0 0.0
    %1044 = vmatpush2.msra.mxu0 0.0
    %1045 = vmatprep.subr.mxu0 0.0
    %1046 = vmatpush2.msra.mxu0 0.0
    %1047 = vmatprep.subr.mxu0 0.0
    %1048 = vmatpush2.msra.mxu0 0.0
    %1049 = vmatprep.subr.mxu0 0.0
    %1050 = vmatpush2.msra.mxu0 0.0
    %1051 = vmatprep.subr.mxu0 0.0
    %1052 = vmatpush2.msra.mxu0 0.0
    %1053 = vmatprep.subr.mxu0 0.0
    %1054 = vmatpush2.msra.mxu0 0.0
    %1055 = vmatprep.subr.mxu0 0.0
    %1056 = vmatpush2.msra.mxu0 0.0
    %1057 = vmatprep.subr.mxu0 0.0
    %1058 = vmatpush2.msra.mxu0 0.0
    %1059 = vmatprep.subr.mxu0 0.0
    %1060 = vmatpush2.msra.mxu0 0.0
    %1061 = vmatprep.subr.mxu0 0.0
    %1062 = vmatpush2.msra.mxu0 0.0
    %1063 = vmatprep.subr.mxu0 0.0
    %1064 = vmatpush2.msra.mxu0 0.0
    %1065 = vmatprep.subr.mxu0 0.0
    %1066 = vmatpush2.msra.mxu0 0.0
    %1067 = vmatprep.subr.mxu0 0.0
    %1068 = vmatpush2.msra.mxu0 0.0
    %1069 = vmatprep.subr.mxu0 0.0
    %1070 = vmatpush2.msra.mxu0 0.0
    %1071 = vmatprep.subr.mxu0 0.0
    %1072 = vmatpush2.msra.mxu0 0.0
    %1073 = vmatprep.subr.mxu0 0.0
    %1074 = vmatpush2.msra.mxu0 0.0
    %1075 = vmatprep.mubr.f32.mxu0 0.0
    %1076 = vmatmul.mubr.f32.gmra.mxu0 %v1009
    %v1077 = vpop.f32.mrf.mxu0
    %v1078 = vadd.f32 %v39, %v1077
    %v1079 = vpop.f32.mrf.mxu0
    %1080 = vdwg.mxu0
    %v1081 = vxor.u32 %v1078, 2147483648
    %v1082 = vmul.f32 %v1081, 1.442695
    %v1083 = vpow.pop %v1082
    %v1084 = vadd.f32 %v1083, 1.0
    %v1085 = vrcp.pop %v1084
    %v1086 = vmul.f32 1.0, %v1085
    %v1087 = vtanh.pop %v1078
    %v1088 = vsub.f32 %v921, %v1087
    %1090 = vrot.lane.b32.xlu0 %v1088, 96
    %v1091 = vpop.permute.xlu0 %1090
    %v1093 = vmul.f32 %v1086, %v1091
    %1095 = vrot.lane.b32.xlu0 %v1093, 32
    %v1096 = vpop.permute.xlu0 %1095
    %v1098 = vadd.f32 %v1087, %v1096
    %v1099 = vtanh.pop %v1098
    %1101 = vrot.lane.b32.xlu0 %v1099, 32
    %v1102 = vpop.permute.xlu0 %1101
    %v1104 = vmul.f32 %v1086, %v1102
    %1106 = vrot.lane.b32.xlu0 %v1104, 64
    %v1107 = vpop.permute.xlu0 %1106
    %s1109 = scalar_lea.vmem [#allocation2], 10
    %1110 = vst.msk [vmem:[%s1109] sm:$0x3] %vm224, %v1107
    %s1111 = scalar_lea.vmem %s0, 12
    %v1112 = vld [vmem:[%s1111] sm:$0x3]
    %v1113 = vsel %vm44, %v1107, 0
    %1115 = vmatprep.subr.mxu0 0.0
    %1116 = vmatpush1.msra.mxu0 0.0
    %1117 = vmatprep.subr.mxu0 0.0
    %1118 = vmatpush1.msra.mxu0 0.0
    %1119 = vmatprep.subr.mxu0 0.0
    %1120 = vmatpush1.msra.mxu0 0.0
    %1121 = vmatprep.subr.mxu0 0.0
    %1122 = vmatpush1.msra.mxu0 0.0
    %1123 = vmatprep.subr.mxu0 0.0
    %1124 = vmatpush1.msra.mxu0 0.0
    %1125 = vmatprep.subr.mxu0 0.0
    %1126 = vmatpush1.msra.mxu0 0.0
    %1127 = vmatprep.subr.mxu0 0.0
    %1128 = vmatpush1.msra.mxu0 0.0
    %1129 = vmatprep.subr.mxu0 0.0
    %1130 = vmatpush1.msra.mxu0 0.0
    %1131 = vmatprep.subr.mxu0 0.0
    %1132 = vmatpush1.msra.mxu0 0.0
    %1133 = vmatprep.subr.mxu0 0.0
    %1134 = vmatpush1.msra.mxu0 0.0
    %1135 = vmatprep.subr.mxu0 0.0
    %1136 = vmatpush1.msra.mxu0 0.0
    %1137 = vmatprep.subr.mxu0 0.0
    %1138 = vmatpush1.msra.mxu0 0.0
    %1139 = vmatprep.subr.mxu0 0.0
    %1140 = vmatpush1.msra.mxu0 %v31
    %1141 = vmatprep.subr.mxu0 0.0
    %1142 = vmatpush1.msra.mxu0 %v30
    %1143 = vmatprep.subr.mxu0 0.0
    %1144 = vmatpush1.msra.mxu0 %v29
    %1145 = vmatprep.subr.mxu0 0.0
    %1146 = vmatpush1.msra.mxu0 %v28
    %1147 = vmatprep.subr.mxu0 0.0
    %1148 = vmatpush2.msra.mxu0 0.0
    %1149 = vmatprep.subr.mxu0 0.0
    %1150 = vmatpush2.msra.mxu0 0.0
    %1151 = vmatprep.subr.mxu0 0.0
    %1152 = vmatpush2.msra.mxu0 0.0
    %1153 = vmatprep.subr.mxu0 0.0
    %1154 = vmatpush2.msra.mxu0 0.0
    %1155 = vmatprep.subr.mxu0 0.0
    %1156 = vmatpush2.msra.mxu0 0.0
    %1157 = vmatprep.subr.mxu0 0.0
    %1158 = vmatpush2.msra.mxu0 0.0
    %1159 = vmatprep.subr.mxu0 0.0
    %1160 = vmatpush2.msra.mxu0 0.0
    %1161 = vmatprep.subr.mxu0 0.0
    %1162 = vmatpush2.msra.mxu0 0.0
    %1163 = vmatprep.subr.mxu0 0.0
    %1164 = vmatpush2.msra.mxu0 0.0
    %1165 = vmatprep.subr.mxu0 0.0
    %1166 = vmatpush2.msra.mxu0 0.0
    %1167 = vmatprep.subr.mxu0 0.0
    %1168 = vmatpush2.msra.mxu0 0.0
    %1169 = vmatprep.subr.mxu0 0.0
    %1170 = vmatpush2.msra.mxu0 0.0
    %1171 = vmatprep.subr.mxu0 0.0
    %1172 = vmatpush2.msra.mxu0 0.0
    %1173 = vmatprep.subr.mxu0 0.0
    %1174 = vmatpush2.msra.mxu0 0.0
    %1175 = vmatprep.subr.mxu0 0.0
    %1176 = vmatpush2.msra.mxu0 0.0
    %1177 = vmatprep.subr.mxu0 0.0
    %1178 = vmatpush2.msra.mxu0 0.0
    %1179 = vmatprep.mubr.f32.mxu0 0.0
    %1180 = vmatmul.mubr.f32.gmra.mxu0 %v1113
    %v1181 = vpop.f32.mrf.mxu0
    %v1182 = vadd.f32 %v1112, %v1181
    %v1183 = vpop.f32.mrf.mxu0
    %1184 = vdwg.mxu0
    %v1186 = vsel %vm118, %v1182, 0
    %1188 = vmatprep.subr.mxu0 0.0
    %1189 = vmatpush1.msra.mxu0 0.0
    %1190 = vmatprep.subr.mxu0 0.0
    %1191 = vmatpush1.msra.mxu0 0.0
    %1192 = vmatprep.subr.mxu0 0.0
    %1193 = vmatpush1.msra.mxu0 0.0
    %1194 = vmatprep.subr.mxu0 0.0
    %1195 = vmatpush1.msra.mxu0 0.0
    %1196 = vmatprep.subr.mxu0 0.0
    %1197 = vmatpush1.msra.mxu0 0.0
    %1198 = vmatprep.subr.mxu0 0.0
    %1199 = vmatpush1.msra.mxu0 0.0
    %1200 = vmatprep.subr.mxu0 0.0
    %1201 = vmatpush1.msra.mxu0 0.0
    %1202 = vmatprep.subr.mxu0 0.0
    %1203 = vmatpush1.msra.mxu0 0.0
    %1204 = vmatprep.subr.mxu0 0.0
    %1205 = vmatpush1.msra.mxu0 0.0
    %1206 = vmatprep.subr.mxu0 0.0
    %1207 = vmatpush1.msra.mxu0 0.0
    %1208 = vmatprep.subr.mxu0 0.0
    %1209 = vmatpush1.msra.mxu0 0.0
    %1210 = vmatprep.subr.mxu0 0.0
    %1211 = vmatpush1.msra.mxu0 0.0
    %1212 = vmatprep.subr.mxu0 0.0
    %1213 = vmatpush1.msra.mxu0 0.0
    %1214 = vmatprep.subr.mxu0 0.0
    %1215 = vmatpush1.msra.mxu0 0.0
    %1216 = vmatprep.subr.mxu0 0.0
    %1217 = vmatpush1.msra.mxu0 %v124
    %1218 = vmatprep.subr.mxu0 0.0
    %1219 = vmatpush1.msra.mxu0 %v32
    %1220 = vmatprep.subr.mxu0 0.0
    %1221 = vmatpush2.msra.mxu0 0.0
    %1222 = vmatprep.subr.mxu0 0.0
    %1223 = vmatpush2.msra.mxu0 0.0
    %1224 = vmatprep.subr.mxu0 0.0
    %1225 = vmatpush2.msra.mxu0 0.0
    %1226 = vmatprep.subr.mxu0 0.0
    %1227 = vmatpush2.msra.mxu0 0.0
    %1228 = vmatprep.subr.mxu0 0.0
    %1229 = vmatpush2.msra.mxu0 0.0
    %1230 = vmatprep.subr.mxu0 0.0
    %1231 = vmatpush2.msra.mxu0 0.0
    %1232 = vmatprep.subr.mxu0 0.0
    %1233 = vmatpush2.msra.mxu0 0.0
    %1234 = vmatprep.subr.mxu0 0.0
    %1235 = vmatpush2.msra.mxu0 0.0
    %1236 = vmatprep.subr.mxu0 0.0
    %1237 = vmatpush2.msra.mxu0 0.0
    %1238 = vmatprep.subr.mxu0 0.0
    %1239 = vmatpush2.msra.mxu0 0.0
    %1240 = vmatprep.subr.mxu0 0.0
    %1241 = vmatpush2.msra.mxu0 0.0
    %1242 = vmatprep.subr.mxu0 0.0
    %1243 = vmatpush2.msra.mxu0 0.0
    %1244 = vmatprep.subr.mxu0 0.0
    %1245 = vmatpush2.msra.mxu0 0.0
    %1246 = vmatprep.subr.mxu0 0.0
    %1247 = vmatpush2.msra.mxu0 0.0
    %1248 = vmatprep.subr.mxu0 0.0
    %1249 = vmatpush2.msra.mxu0 0.0
    %1250 = vmatprep.subr.mxu0 0.0
    %1251 = vmatpush2.msra.mxu0 0.0
    %1252 = vmatprep.mubr.f32.mxu0 0.0
    %1253 = vmatmul.mubr.f32.gmra.mxu0 %v1186
    %v1254 = vpop.f32.mrf.mxu0
    %v1255 = vadd.f32 %v39, %v1254
    %v1256 = vpop.f32.mrf.mxu0
    %1257 = vdwg.mxu0
    %v1258 = vxor.u32 %v1255, 2147483648
    %v1259 = vmul.f32 %v1258, 1.442695
    %v1260 = vpow.pop %v1259
    %v1261 = vadd.f32 %v1260, 1.0
    %v1262 = vrcp.pop %v1261
    %v1263 = vmul.f32 1.0, %v1262
    %v1264 = vtanh.pop %v1255
    %v1265 = vsub.f32 %v1098, %v1264
    %1267 = vrot.lane.b32.xlu0 %v1265, 96
    %v1268 = vpop.permute.xlu0 %1267
    %v1270 = vmul.f32 %v1263, %v1268
    %1272 = vrot.lane.b32.xlu0 %v1270, 32
    %v1273 = vpop.permute.xlu0 %1272
    %v1275 = vadd.f32 %v1264, %v1273
    %v1276 = vtanh.pop %v1275
    %1278 = vrot.lane.b32.xlu0 %v1276, 32
    %v1279 = vpop.permute.xlu0 %1278
    %v1281 = vmul.f32 %v1263, %v1279
    %1283 = vrot.lane.b32.xlu0 %v1281, 64
    %v1284 = vpop.permute.xlu0 %1283
    %s1286 = scalar_lea.vmem [#allocation2], 12
    %1287 = vst.msk [vmem:[%s1286] sm:$0x3] %vm224, %v1284
    %s1288 = scalar_lea.vmem %s0, 14
    %v1289 = vld [vmem:[%s1288] sm:$0x3]
    %v1290 = vsel %vm44, %v1284, 0
    %1292 = vmatprep.subr.mxu0 0.0
    %1293 = vmatpush1.msra.mxu0 0.0
    %1294 = vmatprep.subr.mxu0 0.0
    %1295 = vmatpush1.msra.mxu0 0.0
    %1296 = vmatprep.subr.mxu0 0.0
    %1297 = vmatpush1.msra.mxu0 0.0
    %1298 = vmatprep.subr.mxu0 0.0
    %1299 = vmatpush1.msra.mxu0 0.0
    %1300 = vmatprep.subr.mxu0 0.0
    %1301 = vmatpush1.msra.mxu0 0.0
    %1302 = vmatprep.subr.mxu0 0.0
    %1303 = vmatpush1.msra.mxu0 0.0
    %1304 = vmatprep.subr.mxu0 0.0
    %1305 = vmatpush1.msra.mxu0 0.0
    %1306 = vmatprep.subr.mxu0 0.0
    %1307 = vmatpush1.msra.mxu0 0.0
    %1308 = vmatprep.subr.mxu0 0.0
    %1309 = vmatpush1.msra.mxu0 0.0
    %1310 = vmatprep.subr.mxu0 0.0
    %1311 = vmatpush1.msra.mxu0 0.0
    %1312 = vmatprep.subr.mxu0 0.0
    %1313 = vmatpush1.msra.mxu0 0.0
    %1314 = vmatprep.subr.mxu0 0.0
    %1315 = vmatpush1.msra.mxu0 0.0
    %1316 = vmatprep.subr.mxu0 0.0
    %1317 = vmatpush1.msra.mxu0 %v31
    %1318 = vmatprep.subr.mxu0 0.0
    %1319 = vmatpush1.msra.mxu0 %v30
    %1320 = vmatprep.subr.mxu0 0.0
    %1321 = vmatpush1.msra.mxu0 %v29
    %1322 = vmatprep.subr.mxu0 0.0
    %1323 = vmatpush1.msra.mxu0 %v28
    %1324 = vmatprep.subr.mxu0 0.0
    %1325 = vmatpush2.msra.mxu0 0.0
    %1326 = vmatprep.subr.mxu0 0.0
    %1327 = vmatpush2.msra.mxu0 0.0
    %1328 = vmatprep.subr.mxu0 0.0
    %1329 = vmatpush2.msra.mxu0 0.0
    %1330 = vmatprep.subr.mxu0 0.0
    %1331 = vmatpush2.msra.mxu0 0.0
    %1332 = vmatprep.subr.mxu0 0.0
    %1333 = vmatpush2.msra.mxu0 0.0
    %1334 = vmatprep.subr.mxu0 0.0
    %1335 = vmatpush2.msra.mxu0 0.0
    %1336 = vmatprep.subr.mxu0 0.0
    %1337 = vmatpush2.msra.mxu0 0.0
    %1338 = vmatprep.subr.mxu0 0.0
    %1339 = vmatpush2.msra.mxu0 0.0
    %1340 = vmatprep.subr.mxu0 0.0
    %1341 = vmatpush2.msra.mxu0 0.0
    %1342 = vmatprep.subr.mxu0 0.0
    %1343 = vmatpush2.msra.mxu0 0.0
    %1344 = vmatprep.subr.mxu0 0.0
    %1345 = vmatpush2.msra.mxu0 0.0
    %1346 = vmatprep.subr.mxu0 0.0
    %1347 = vmatpush2.msra.mxu0 0.0
    %1348 = vmatprep.subr.mxu0 0.0
    %1349 = vmatpush2.msra.mxu0 0.0
    %1350 = vmatprep.subr.mxu0 0.0
    %1351 = vmatpush2.msra.mxu0 0.0
    %1352 = vmatprep.subr.mxu0 0.0
    %1353 = vmatpush2.msra.mxu0 0.0
    %1354 = vmatprep.subr.mxu0 0.0
    %1355 = vmatpush2.msra.mxu0 0.0
    %1356 = vmatprep.mubr.f32.mxu0 0.0
    %1357 = vmatmul.mubr.f32.gmra.mxu0 %v1290
    %v1358 = vpop.f32.mrf.mxu0
    %v1359 = vadd.f32 %v1289, %v1358
    %v1360 = vpop.f32.mrf.mxu0
    %1361 = vdwg.mxu0
    %v1363 = vsel %vm118, %v1359, 0
    %1365 = vmatprep.subr.mxu0 0.0
    %1366 = vmatpush1.msra.mxu0 0.0
    %1367 = vmatprep.subr.mxu0 0.0
    %1368 = vmatpush1.msra.mxu0 0.0
    %1369 = vmatprep.subr.mxu0 0.0
    %1370 = vmatpush1.msra.mxu0 0.0
    %1371 = vmatprep.subr.mxu0 0.0
    %1372 = vmatpush1.msra.mxu0 0.0
    %1373 = vmatprep.subr.mxu0 0.0
    %1374 = vmatpush1.msra.mxu0 0.0
    %1375 = vmatprep.subr.mxu0 0.0
    %1376 = vmatpush1.msra.mxu0 0.0
    %1377 = vmatprep.subr.mxu0 0.0
    %1378 = vmatpush1.msra.mxu0 0.0
    %1379 = vmatprep.subr.mxu0 0.0
    %1380 = vmatpush1.msra.mxu0 0.0
    %1381 = vmatprep.subr.mxu0 0.0
    %1382 = vmatpush1.msra.mxu0 0.0
    %1383 = vmatprep.subr.mxu0 0.0
    %1384 = vmatpush1.msra.mxu0 0.0
    %1385 = vmatprep.subr.mxu0 0.0
    %1386 = vmatpush1.msra.mxu0 0.0
    %1387 = vmatprep.subr.mxu0 0.0
    %1388 = vmatpush1.msra.mxu0 0.0
    %1389 = vmatprep.subr.mxu0 0.0
    %1390 = vmatpush1.msra.mxu0 0.0
    %1391 = vmatprep.subr.mxu0 0.0
    %1392 = vmatpush1.msra.mxu0 0.0
    %1393 = vmatprep.subr.mxu0 0.0
    %1394 = vmatpush1.msra.mxu0 %v124
    %1395 = vmatprep.subr.mxu0 0.0
    %1396 = vmatpush1.msra.mxu0 %v32
    %1397 = vmatprep.subr.mxu0 0.0
    %1398 = vmatpush2.msra.mxu0 0.0
    %1399 = vmatprep.subr.mxu0 0.0
    %1400 = vmatpush2.msra.mxu0 0.0
    %1401 = vmatprep.subr.mxu0 0.0
    %1402 = vmatpush2.msra.mxu0 0.0
    %1403 = vmatprep.subr.mxu0 0.0
    %1404 = vmatpush2.msra.mxu0 0.0
    %1405 = vmatprep.subr.mxu0 0.0
    %1406 = vmatpush2.msra.mxu0 0.0
    %1407 = vmatprep.subr.mxu0 0.0
    %1408 = vmatpush2.msra.mxu0 0.0
    %1409 = vmatprep.subr.mxu0 0.0
    %1410 = vmatpush2.msra.mxu0 0.0
    %1411 = vmatprep.subr.mxu0 0.0
    %1412 = vmatpush2.msra.mxu0 0.0
    %1413 = vmatprep.subr.mxu0 0.0
    %1414 = vmatpush2.msra.mxu0 0.0
    %1415 = vmatprep.subr.mxu0 0.0
    %1416 = vmatpush2.msra.mxu0 0.0
    %1417 = vmatprep.subr.mxu0 0.0
    %1418 = vmatpush2.msra.mxu0 0.0
    %1419 = vmatprep.subr.mxu0 0.0
    %1420 = vmatpush2.msra.mxu0 0.0
    %1421 = vmatprep.subr.mxu0 0.0
    %1422 = vmatpush2.msra.mxu0 0.0
    %1423 = vmatprep.subr.mxu0 0.0
    %1424 = vmatpush2.msra.mxu0 0.0
    %1425 = vmatprep.subr.mxu0 0.0
    %1426 = vmatpush2.msra.mxu0 0.0
    %1427 = vmatprep.subr.mxu0 0.0
    %1428 = vmatpush2.msra.mxu0 0.0
    %1429 = vmatprep.mubr.f32.mxu0 0.0
    %1430 = vmatmul.mubr.f32.gmra.mxu0 %v1363
    %v1431 = vpop.f32.mrf.mxu0
    %v1432 = vadd.f32 %v39, %v1431
    %v1433 = vpop.f32.mrf.mxu0
    %1434 = vdwg.mxu0
    %v1435 = vxor.u32 %v1432, 2147483648
    %v1436 = vmul.f32 %v1435, 1.442695
    %v1437 = vpow.pop %v1436
    %v1438 = vadd.f32 %v1437, 1.0
    %v1439 = vrcp.pop %v1438
    %v1440 = vmul.f32 1.0, %v1439
    %v1441 = vtanh.pop %v1432
    %v1442 = vsub.f32 %v1275, %v1441
    %1444 = vrot.lane.b32.xlu0 %v1442, 96
    %v1445 = vpop.permute.xlu0 %1444
    %v1447 = vmul.f32 %v1440, %v1445
    %1449 = vrot.lane.b32.xlu0 %v1447, 32
    %v1450 = vpop.permute.xlu0 %1449
    %v1452 = vadd.f32 %v1441, %v1450
    %v1453 = vtanh.pop %v1452
    %1455 = vrot.lane.b32.xlu0 %v1453, 32
    %v1456 = vpop.permute.xlu0 %1455
    %v1458 = vmul.f32 %v1440, %v1456
    %1460 = vrot.lane.b32.xlu0 %v1458, 64
    %v1461 = vpop.permute.xlu0 %1460
    %s1463 = scalar_lea.vmem [#allocation2], 14
    %1464 = vst.msk [vmem:[%s1463] sm:$0x3] %vm224, %v1461
    %1465 = vst.msk [vmem:[#allocation4] sm:$0x3] %vm224, %v1461
    %1467 = vrot.lane.b32.xlu0 %v1452, 96
    %v1468 = vpop.permute.xlu0 %1467
    %1470 = vst.msk [vmem:[#allocation6] sm:$0x3] %vm224, %v1468
    // Predicated region
    $region26: #{cifg_qlstm.1} parent=1 // pred_check
      _
    $region27: #{cifg_qlstm.1} parent=1 // pred_check_branch
      %1472 = sbr.rel (0) target = $region29
    $region28: #{cifg_qlstm.1} parent=1 // pred_region
      %s1474 = ssub.s32 256, 256
      %1475 = vsyncadd [#allocation3], %s1474
      %s1476 = sshll.u32 [#allocation2], 4
      %s1477 = int_to_ptr.vmem [resolvable:$true] %s1476
      %1482 = dma.vmem_to_hbm [thread:$0]  %s1477, 256, %s6, [#allocation3], 32, 32, 2
    $region29: #{cifg_qlstm.1} parent=1 // pred_fallthru
      _
    // Predicated region
    $region30: #{cifg_qlstm.1} parent=1 // pred_check
      _
    $region31: #{cifg_qlstm.1} parent=1 // pred_check_branch
      %1484 = sbr.rel (0) target = $region33
    $region32: #{cifg_qlstm.1} parent=1 // pred_region
      %s1486 = ssub.s32 32, 32
      %1487 = vsyncadd [#allocation5], %s1486
      %s1489 = sshll.u32 [#allocation4], 4
      %s1490 = int_to_ptr.vmem [resolvable:$true] %s1489
      %1492 = dma.vmem_to_hbm [thread:$0]  %s1490, 32, %s7, [#allocation5]
    $region33: #{cifg_qlstm.1} parent=1 // pred_fallthru
      _
    // Predicated region
    $region34: #{cifg_qlstm.1} parent=1 // pred_check
      _
    $region35: #{cifg_qlstm.1} parent=1 // pred_check_branch
      %1494 = sbr.rel (0) target = $region37
    $region36: #{cifg_qlstm.1} parent=1 // pred_region
      %s1496 = ssub.s32 32, 32
      %1497 = vsyncadd [#allocation5], %s1496
      %s1499 = sshll.u32 [#allocation6], 4
      %s1500 = int_to_ptr.vmem [resolvable:$true] %s1499
      %1502 = dma.vmem_to_hbm [thread:$0]  %s1500, 32, %s8, [#allocation5]
    $region37: #{cifg_qlstm.1} parent=1 // pred_fallthru
      _
    // Predicated region
    $region38: #{cifg_qlstm.1} parent=1 // pred_check
      _
    $region39: #{cifg_qlstm.1} parent=1 // pred_check_branch
      %1504 = sbr.rel (0) target = $region41
    $region40: #{cifg_qlstm.1} parent=1 // pred_region
      %1505 = dma.done [#allocation3], 256
    $region41: #{cifg_qlstm.1} parent=1 // pred_fallthru
      _
    // Predicated region
    $region42: #{cifg_qlstm.1} parent=1 // pred_check
      _
    $region43: #{cifg_qlstm.1} parent=1 // pred_check_branch
      %1507 = sbr.rel (0) target = $region45
    $region44: #{cifg_qlstm.1} parent=1 // pred_region
      %1508 = dma.done [#allocation5], 32
    $region45: #{cifg_qlstm.1} parent=1 // pred_fallthru
      _
    // Predicated region
    $region46: #{cifg_qlstm.1} parent=1 // pred_check
      _
    $region47: #{cifg_qlstm.1} parent=1 // pred_check_branch
      %1510 = sbr.rel (0) target = $region49
    $region48: #{cifg_qlstm.1} parent=1 // pred_region
      %1511 = dma.done [#allocation5], 32
    $region49: #{cifg_qlstm.1} parent=1 // pred_fallthru
      _
    %1512 = vsyncpa [#allocation3], 1
    %1513 = vsyncpa [#allocation5], 1

</llo_original>
